<compile_context>
chip_gen: v7x
topology: tpu7x:2x2x1
jax: 0.10.0
libtpu: 0.0.40
codegen_flags: <defaults>
</compile_context>

<pallas_src>
import functools
import math

import jax
import jax.numpy as jnp
from jax.experimental import pallas as pl
from jax.experimental.pallas import tpu as pltpu


# ----------------------------------------------------------------------------
# Kernel: 5 serial MXU matmuls, one lane-dense [TB, 128] store.
# ----------------------------------------------------------------------------
def actor_critic_kernel(
    state_ref,                  # [TB, state_dim] f32
    we1,                        # [state_dim, 64]  bf16 fused encoder layer-1
    wm1m, wm1e,                 # [state_dim,512], [64,512] bf16 main layer-1 K-split
    wh1,                        # [512, 384] bf16 fused heads (wm2 folded in)
    wh2,                        # [256, 128] bf16 critic stage-2 (block-diagonal)
    b_ref,                      # [4, 512] f32 bias slab
    out_ref,                    # [TB, 128] f32 output slab
    *, action_dim,
):
    xb = state_ref[...].astype(jnp.bfloat16)

    # fused block-diagonal encoder layer-1 (scope | relationship | quality) + ReLU
    h1 = jnp.maximum(
        jnp.dot(xb, we1[...], preferred_element_type=jnp.float32) + b_ref[0:1, 0:64],
        0.0)                                                        # [TB, 64]

    # main layer-1 as a K-split (encoder layer-2 folded into wm1e) + ReLU
    hm = jnp.maximum(
        jnp.dot(xb, wm1m[...], preferred_element_type=jnp.float32)
        + jnp.dot(h1.astype(jnp.bfloat16), wm1e[...],
                  preferred_element_type=jnp.float32)
        + b_ref[1:2, 0:512],
        0.0)                                                        # [TB, 512]

    # fused heads (main layer-2 folded in): [ value-128 | quality-128 | actor(pad)-128 ]
    h = (jnp.dot(hm.astype(jnp.bfloat16), wh1[...],
                 preferred_element_type=jnp.float32) + b_ref[2:3, 0:384])  # [TB, 384]

    # actor: log-softmax over lanes 256:384 (padded columns carry a -1e30 bias)
    logits = h[:, 256:384]                                          # [TB, 128]
    m = jnp.max(logits, axis=-1, keepdims=True)
    lse = m + jnp.log(jnp.sum(jnp.exp(logits - m), axis=-1, keepdims=True))
    logp = logits - lse

    # critic stage-2: block-diag -> value at lane A, quality at lanes A+1..A+4
    hr = jnp.maximum(h[:, 0:256], 0.0)
    vq = (jnp.dot(hr.astype(jnp.bfloat16), wh2[...],
                  preferred_element_type=jnp.float32) + b_ref[3:4, 0:128])  # [TB, 128]

    # single lane-dense 128-wide store: logp in lanes < A, value/quality above.
    lane = jax.lax.broadcasted_iota(jnp.int32, logp.shape, 1)
    out_ref[...] = jnp.where(lane < action_dim, logp, vq)


# ----------------------------------------------------------------------------
# Parameter init (PyTorch-Linear-style, weights stored as [in, out])
# ----------------------------------------------------------------------------
def init_params(key, state_dim, action_dim):
    def linear(k, fan_in, fan_out):
        kw, kb = jax.random.split(k)
        bound = 1.0 / math.sqrt(fan_in)
        w = jax.random.uniform(kw, (fan_in, fan_out), jnp.float32, -bound, bound)
        b = jax.random.uniform(kb, (1, fan_out), jnp.float32, -bound, bound)
        return [w, b]

    keys = jax.random.split(key, 15)
    main_in = (state_dim - 20) + 64 + 32 + 32

    params = []
    params += linear(keys[0], 13, 32) + linear(keys[1], 32, 64)          # scope
    params += linear(keys[2], 3, 16) + linear(keys[3], 16, 32)           # relationship
    params += linear(keys[4], 4, 16) + linear(keys[5], 16, 32)           # quality
    params += linear(keys[6], main_in, 512) + linear(keys[7], 512, 256)  # main
    params += linear(keys[8], 256, 256) + linear(keys[9], 256, 256)      # attn V, out_proj
    params += linear(keys[10], 256, action_dim)                          # actor
    params += linear(keys[11], 256, 128) + linear(keys[12], 128, 1)      # critic_value
    params += linear(keys[13], 256, 128) + linear(keys[14], 128, 4)      # critic_quality
    return params


# ----------------------------------------------------------------------------
# Pack PyTorch-style params into 5 fused bf16 weight slabs + one f32 bias slab.
# All algebraic folds are composed in f32, cast to bf16 once at the end.
# ----------------------------------------------------------------------------
def pack_params(params, state_dim, action_dim):
    (sw1, sb1, sw2, sb2,
     rw1, rb1, rw2, rb2,
     qw1, qb1, qw2, qb2,
     mw1, mb1, mw2, mb2,
     wv, bv, wo, bo,
     aw, ab,
     vw1, vb1, vw2, vb2,
     cw1, cb1, cw2, cb2) = params

    A = action_dim
    assert A + 5 <= 128
    main_in = state_dim - 20
    f32 = jnp.float32

    # Encoder layer 1: block-diagonal over features 0:20, zero rows for main features.
    we1 = jnp.zeros((state_dim, 64), f32)
    we1 = we1.at[0:13, 0:32].set(sw1)
    we1 = we1.at[13:16, 32:48].set(rw1)
    we1 = we1.at[16:20, 48:64].set(qw1)
    be1 = jnp.concatenate([sb1, rb1, qb1], axis=-1)                  # [1, 64]

    # Encoder layer 2 block-diagonal [64,128] -> [scope64 | rel32 | qual32]
    we2 = jnp.zeros((64, 128), f32)
    we2 = we2.at[0:32, 0:64].set(sw2)
    we2 = we2.at[32:48, 64:96].set(rw2)
    we2 = we2.at[48:64, 96:128].set(qw2)
    be2 = jnp.concatenate([sb2, rb2, qb2], axis=-1)                  # [1, 128]

    # Main layer 1 K-split; fold encoder layer 2 into the encoder-side weight
    # (no nonlinearity between them): enc@wm1e == h1@(we2@wm1e) + be2@wm1e.
    wm1m = jnp.zeros((state_dim, 512), f32).at[20:20 + main_in, :].set(mw1[:main_in])
    wm1e_raw = mw1[main_in:, :]                                      # [128, 512]
    wm1e = we2 @ wm1e_raw                                            # [64, 512]
    bm1 = mb1 + be2 @ wm1e_raw                                       # [1, 512]

    # Seq-len-1 attention is linear -> fold V/out_proj/actor into one weight.
    w_act = wv @ wo @ aw                                             # [256, A]
    b_act = (bv @ wo + bo) @ aw + ab                                 # [1, A]

    # Head stage 1 on feats: [ value-128 | quality-128 | actor(pad)-128 ] ...
    wh1_256 = jnp.zeros((256, 384), f32)
    wh1_256 = wh1_256.at[:, 0:128].set(vw1).at[:, 128:256].set(cw1)
    wh1_256 = wh1_256.at[:, 256:256 + A].set(w_act)
    bh1 = jnp.zeros((1, 384), f32)
    bh1 = bh1.at[:, 0:128].set(vb1).at[:, 128:256].set(cb1).at[:, 256:256 + A].set(b_act)

    # ... then fold main layer-2 into it (feats is affine in hm, no ReLU between).
    wh1 = mw2 @ wh1_256                                              # [512, 384]
    bh1 = mb2 @ wh1_256 + bh1                                        # [1, 384]
    bh1 = bh1.at[:, 256 + A:384].set(-1e30)   # mask padded logit cols (kept in f32)

    # Head stage 2 block-diagonal [256,128]: value -> lane A, quality -> lanes A+1..A+4.
    wh2 = jnp.zeros((256, 128), f32)
    wh2 = wh2.at[0:128, A:A + 1].set(vw2).at[128:256, A + 1:A + 5].set(cw2)
    bh2 = jnp.zeros((1, 128), f32).at[:, A:A + 1].set(vb2).at[:, A + 1:A + 5].set(cb2)

    # Bias slab [4, 512] (f32): one row per stage, zero-padded to 512 lanes.
    bias = jnp.zeros((4, 512), f32)
    bias = bias.at[0, 0:64].set(be1[0])
    bias = bias.at[1, 0:512].set(bm1[0])
    bias = bias.at[2, 0:384].set(bh1[0])
    bias = bias.at[3, 0:128].set(bh2[0])

    bf = jnp.bfloat16
    weights = [w.astype(bf) for w in (we1, wm1m, wm1e, wh1, wh2)]
    return weights + [bias]


# ----------------------------------------------------------------------------
# Wrapper
# ----------------------------------------------------------------------------
def actor_critic_forward(state, packed, action_dim, block_b=None):
    B, sd = state.shape

    if block_b is None:
        # Tile up to 512 rows (multiple of 16 for bf16 sublane packing); for
        # mid/large batches cap at ceil(B/2) so the grid has >=2 steps and
        # both v7x TensorCores get work (harmless on single-TC v5e/v6e).
        half = -(-B // 2)
        half = ((half + 15) // 16) * 16
        tb = min(512, max(16, half))
    else:
        tb = max(16, ((block_b + 15) // 16) * 16)

    bp = ((B + tb - 1) // tb) * tb
    if bp != B:
        state = jnp.pad(state, ((0, bp - B), (0, 0)))

    grid = (bp // tb,)
    w_specs = [pl.BlockSpec(w.shape, lambda i: (0, 0)) for w in packed]

    out = pl.pallas_call(
        functools.partial(actor_critic_kernel, action_dim=action_dim),
        out_shape=jax.ShapeDtypeStruct((bp, 128), jnp.float32),
        grid=grid,
        in_specs=[pl.BlockSpec((tb, sd), lambda i: (i, 0))] + w_specs,
        out_specs=pl.BlockSpec((tb, 128), lambda i: (i, 0)),
        compiler_params=pltpu.CompilerParams(dimension_semantics=("parallel",)),
    )(state, *packed)

    A = action_dim
    logp = out[:B, 0:A]
    value = out[:B, A:A + 1]
    quality = out[:B, A + 1:A + 5]
    return logp, value, quality


# ----------------------------------------------------------------------------
# Pure-JAX reference (faithful to the PyTorch module, f32, eval mode)
# ----------------------------------------------------------------------------
def reference_forward(state, params):
    (sw1, sb1, sw2, sb2, rw1, rb1, rw2, rb2, qw1, qb1, qw2, qb2,
     mw1, mb1, mw2, mb2, wv, bv, wo, bo, aw, ab,
     vw1, vb1, vw2, vb2, cw1, cb1, cw2, cb2) = params
    relu = lambda t: jnp.maximum(t, 0.0)
    scope = relu(state[:, :13] @ sw1 + sb1) @ sw2 + sb2
    rel = relu(state[:, 13:16] @ rw1 + rb1) @ rw2 + rb2
    qual = relu(state[:, 16:20] @ qw1 + qb1) @ qw2 + qb2
    combined = jnp.concatenate([state[:, 20:], scope, rel, qual], axis=-1)
    feats = relu(combined @ mw1 + mb1) @ mw2 + mb2
    attended = (feats @ wv + bv) @ wo + bo     # seq-len-1 MHA == out_proj(V_proj(x))
    logits = attended @ aw + ab
    logp = jax.nn.log_softmax(logits, axis=-1)
    value = relu(feats @ vw1 + vb1) @ vw2 + vb2
    quality = relu(feats @ cw1 + cb1) @ cw2 + cb2
    return logp, value, quality


if __name__ == "__main__":
    state_dim = 36   # 13 scope + 3 relationship + 4 quality + 16 main features
    action_dim = 8
    batch = 8

    key = jax.random.PRNGKey(0)
    k_state, k_params = jax.random.split(key)
    state = jax.random.normal(k_state, (batch, state_dim), dtype=jnp.float32)
    params = init_params(k_params, state_dim, action_dim)
    packed = pack_params(params, state_dim, action_dim)

    logp, value, quality = jax.block_until_ready(
        actor_critic_forward(state, packed, action_dim)
    )

    assert logp.shape == (batch, action_dim) and logp.dtype == jnp.float32
    assert value.shape == (batch, 1) and value.dtype == jnp.float32
    assert quality.shape == (batch, 4) and quality.dtype == jnp.float32
    # log-softmax rows must (approximately) normalize to 1.
    assert bool(jnp.all(jnp.abs(jnp.sum(jnp.exp(logp), axis=-1) - 1.0) < 1e-4))

    # Compare against the faithful f32 reference (bf16 folded weights -> loose tol).
    rlogp, rvalue, rquality = reference_forward(state, params)
    assert bool(jnp.max(jnp.abs(logp - rlogp)) < 4e-2)
    assert bool(jnp.max(jnp.abs(value - rvalue)) < 4e-2)
    assert bool(jnp.max(jnp.abs(quality - rquality)) < 4e-2)

    print("KERNEL_OK")
</pallas_src>

<mosaic_0001>
module attributes {stable_mosaic.version = 11 : i64} {
  func.func @actor_critic_kernel(%arg0: i32, %arg1: memref<16x36xf32, #tpu.memory_space<vmem>>, %arg2: memref<36x64xbf16, #tpu.memory_space<vmem>>, %arg3: memref<36x512xbf16, #tpu.memory_space<vmem>>, %arg4: memref<64x512xbf16, #tpu.memory_space<vmem>>, %arg5: memref<512x384xbf16, #tpu.memory_space<vmem>>, %arg6: memref<256x128xbf16, #tpu.memory_space<vmem>>, %arg7: memref<4x512xf32, #tpu.memory_space<vmem>>, %arg8: memref<16x128xf32, #tpu.memory_space<vmem>>) attributes {dimension_semantics = [#tpu.dimension_semantics<parallel>], iteration_bounds = array<i64: 1>, scalar_prefetch = 0 : i64, scratch_operands = 0 : i64, tpu.core_type = #tpu.core_type<tc>, window_params = [{transform_indices = @transform_0, window_bounds = array<i64: 16, 36>}, {pipeline_mode = #tpu.pipeline_mode<synchronous>, transform_indices = @transform_1, window_bounds = array<i64: 36, 64>}, {pipeline_mode = #tpu.pipeline_mode<synchronous>, transform_indices = @transform_2, window_bounds = array<i64: 36, 512>}, {pipeline_mode = #tpu.pipeline_mode<synchronous>, transform_indices = @transform_3, window_bounds = array<i64: 64, 512>}, {pipeline_mode = #tpu.pipeline_mode<synchronous>, transform_indices = @transform_4, window_bounds = array<i64: 512, 384>}, {pipeline_mode = #tpu.pipeline_mode<synchronous>, transform_indices = @transform_5, window_bounds = array<i64: 256, 128>}, {pipeline_mode = #tpu.pipeline_mode<synchronous>, transform_indices = @transform_6, window_bounds = array<i64: 4, 512>}, {transform_indices = @transform_7, window_bounds = array<i64: 16, 128>}]} {
    %c0 = arith.constant 0 : index
    %c0_0 = arith.constant 0 : index
    %0 = vector.load %arg1[%c0, %c0_0] : memref<16x36xf32, #tpu.memory_space<vmem>>, vector<16x36xf32>
    %1 = arith.truncf %0 : vector<16x36xf32> to vector<16x36xbf16>
    %c0_1 = arith.constant 0 : index
    %c0_2 = arith.constant 0 : index
    %2 = vector.load %arg2[%c0_1, %c0_2] : memref<36x64xbf16, #tpu.memory_space<vmem>>, vector<36x64xbf16>
    %cst = arith.constant dense<0.000000e+00> : vector<16x64xf32>
    %3 = tpu.matmul %1, %2, %cst {dimension_numbers = #tpu.dot_dimension_numbers<[1], [0], [0], [1], [0, 0, 1, 1], [], []>} : vector<16x36xbf16>, vector<36x64xbf16>, vector<16x64xf32> -> vector<16x64xf32>
    %c0_3 = arith.constant 0 : index
    %c0_4 = arith.constant 0 : index
    %4 = vector.load %arg7[%c0_3, %c0_4] : memref<4x512xf32, #tpu.memory_space<vmem>>, vector<1x64xf32>
    %5 = vector.broadcast %4 : vector<1x64xf32> to vector<16x64xf32>
    %6 = arith.addf %3, %5 : vector<16x64xf32>
    %cst_5 = arith.constant 0.000000e+00 : f32
    %7 = vector.broadcast %cst_5 : f32 to vector<16x64xf32>
    %8 = arith.maximumf %6, %7 : vector<16x64xf32>
    %c0_6 = arith.constant 0 : index
    %c0_7 = arith.constant 0 : index
    %9 = vector.load %arg3[%c0_6, %c0_7] : memref<36x512xbf16, #tpu.memory_space<vmem>>, vector<36x512xbf16>
    %cst_8 = arith.constant dense<0.000000e+00> : vector<16x512xf32>
    %10 = tpu.matmul %1, %9, %cst_8 {dimension_numbers = #tpu.dot_dimension_numbers<[1], [0], [0], [1], [0, 0, 1, 1], [], []>} : vector<16x36xbf16>, vector<36x512xbf16>, vector<16x512xf32> -> vector<16x512xf32>
    %11 = arith.truncf %8 : vector<16x64xf32> to vector<16x64xbf16>
    %c0_9 = arith.constant 0 : index
    %c0_10 = arith.constant 0 : index
    %12 = vector.load %arg4[%c0_9, %c0_10] : memref<64x512xbf16, #tpu.memory_space<vmem>>, vector<64x512xbf16>
    %cst_11 = arith.constant dense<0.000000e+00> : vector<16x512xf32>
    %13 = tpu.matmul %11, %12, %cst_11 {dimension_numbers = #tpu.dot_dimension_numbers<[1], [0], [0], [1], [0, 0, 1, 1], [], []>} : vector<16x64xbf16>, vector<64x512xbf16>, vector<16x512xf32> -> vector<16x512xf32>
    %14 = arith.addf %10, %13 : vector<16x512xf32>
    %c1 = arith.constant 1 : index
    %c0_12 = arith.constant 0 : index
    %15 = vector.load %arg7[%c1, %c0_12] : memref<4x512xf32, #tpu.memory_space<vmem>>, vector<1x512xf32>
    %16 = vector.broadcast %15 : vector<1x512xf32> to vector<16x512xf32>
    %17 = arith.addf %14, %16 : vector<16x512xf32>
    %cst_13 = arith.constant 0.000000e+00 : f32
    %18 = vector.broadcast %cst_13 : f32 to vector<16x512xf32>
    %19 = arith.maximumf %17, %18 : vector<16x512xf32>
    %20 = arith.truncf %19 : vector<16x512xf32> to vector<16x512xbf16>
    %c0_14 = arith.constant 0 : index
    %c0_15 = arith.constant 0 : index
    %21 = vector.load %arg5[%c0_14, %c0_15] : memref<512x384xbf16, #tpu.memory_space<vmem>>, vector<512x384xbf16>
    %cst_16 = arith.constant dense<0.000000e+00> : vector<16x384xf32>
    %22 = tpu.matmul %20, %21, %cst_16 {dimension_numbers = #tpu.dot_dimension_numbers<[1], [0], [0], [1], [0, 0, 1, 1], [], []>} : vector<16x512xbf16>, vector<512x384xbf16>, vector<16x384xf32> -> vector<16x384xf32>
    %c2 = arith.constant 2 : index
    %c0_17 = arith.constant 0 : index
    %23 = vector.load %arg7[%c2, %c0_17] : memref<4x512xf32, #tpu.memory_space<vmem>>, vector<1x384xf32>
    %24 = vector.broadcast %23 : vector<1x384xf32> to vector<16x384xf32>
    %25 = arith.addf %22, %24 : vector<16x384xf32>
    %26 = vector.extract_strided_slice %25 {offsets = [0, 256], sizes = [16, 128], strides = [1, 1]} : vector<16x384xf32> to vector<16x128xf32>
    %cst_18 = arith.constant dense<0xFF800000> : vector<16xf32>
    %27 = vector.multi_reduction <maximumf>, %26, %cst_18 [1] : vector<16x128xf32> to vector<16xf32>
    %28 = vector.shape_cast %27 : vector<16xf32> to vector<16x1xf32>
    %29 = vector.broadcast %28 : vector<16x1xf32> to vector<16x128xf32>
    %30 = arith.subf %26, %29 : vector<16x128xf32>
    %31 = math.exp %30 : vector<16x128xf32>
    %cst_19 = arith.constant dense<0.000000e+00> : vector<16xf32>
    %32 = vector.multi_reduction <add>, %31, %cst_19 [1] : vector<16x128xf32> to vector<16xf32>
    %33 = vector.shape_cast %32 : vector<16xf32> to vector<16x1xf32>
    %34 = math.log %33 : vector<16x1xf32>
    %35 = arith.addf %28, %34 : vector<16x1xf32>
    %36 = vector.broadcast %35 : vector<16x1xf32> to vector<16x128xf32>
    %37 = arith.subf %26, %36 : vector<16x128xf32>
    %38 = vector.extract_strided_slice %25 {offsets = [0, 0], sizes = [16, 256], strides = [1, 1]} : vector<16x384xf32> to vector<16x256xf32>
    %cst_20 = arith.constant 0.000000e+00 : f32
    %39 = vector.broadcast %cst_20 : f32 to vector<16x256xf32>
    %40 = arith.maximumf %38, %39 : vector<16x256xf32>
    %41 = arith.truncf %40 : vector<16x256xf32> to vector<16x256xbf16>
    %c0_21 = arith.constant 0 : index
    %c0_22 = arith.constant 0 : index
    %42 = vector.load %arg6[%c0_21, %c0_22] : memref<256x128xbf16, #tpu.memory_space<vmem>>, vector<256x128xbf16>
    %cst_23 = arith.constant dense<0.000000e+00> : vector<16x128xf32>
    %43 = tpu.matmul %41, %42, %cst_23 {dimension_numbers = #tpu.dot_dimension_numbers<[1], [0], [0], [1], [0, 0, 1, 1], [], []>} : vector<16x256xbf16>, vector<256x128xbf16>, vector<16x128xf32> -> vector<16x128xf32>
    %c3 = arith.constant 3 : index
    %c0_24 = arith.constant 0 : index
    %44 = vector.load %arg7[%c3, %c0_24] : memref<4x512xf32, #tpu.memory_space<vmem>>, vector<1x128xf32>
    %45 = vector.broadcast %44 : vector<1x128xf32> to vector<16x128xf32>
    %46 = arith.addf %43, %45 : vector<16x128xf32>
    %47 = tpu.iota {dimensions = array<i32: 1>} : vector<16x128xi32>
    %c8_i32 = arith.constant 8 : i32
    %48 = vector.broadcast %c8_i32 : i32 to vector<16x128xi32>
    %49 = arith.cmpi slt, %47, %48 : vector<16x128xi32>
    %50 = arith.select %49, %37, %46 : vector<16x128xi1>, vector<16x128xf32>
    %c0_25 = arith.constant 0 : index
    %c0_26 = arith.constant 0 : index
    %51 = vector.load %arg8[%c0_25, %c0_26] : memref<16x128xf32, #tpu.memory_space<vmem>>, vector<16x128xf32>
    tpu.vector_store %arg8[%c0_25, %c0_26], %50 {strides = array<i32>} : memref<16x128xf32, #tpu.memory_space<vmem>>, vector<16x128xf32>,
    return
  }
  func.func @transform_0(%arg0: i32) -> (i32, i32) {
    %c0_i32 = arith.constant 0 : i32
    %c0_i32_0 = arith.constant 0 : i32
    return %arg0, %c0_i32 : i32, i32
  }
  func.func @transform_1(%arg0: i32) -> (i32, i32) {
    %c0_i32 = arith.constant 0 : i32
    %c0_i32_0 = arith.constant 0 : i32
    %c0_i32_1 = arith.constant 0 : i32
    return %c0_i32, %c0_i32_0 : i32, i32
  }
  func.func @transform_2(%arg0: i32) -> (i32, i32) {
    %c0_i32 = arith.constant 0 : i32
    %c0_i32_0 = arith.constant 0 : i32
    %c0_i32_1 = arith.constant 0 : i32
    return %c0_i32, %c0_i32_0 : i32, i32
  }
  func.func @transform_3(%arg0: i32) -> (i32, i32) {
    %c0_i32 = arith.constant 0 : i32
    %c0_i32_0 = arith.constant 0 : i32
    %c0_i32_1 = arith.constant 0 : i32
    return %c0_i32, %c0_i32_0 : i32, i32
  }
  func.func @transform_4(%arg0: i32) -> (i32, i32) {
    %c0_i32 = arith.constant 0 : i32
    %c0_i32_0 = arith.constant 0 : i32
    %c0_i32_1 = arith.constant 0 : i32
    return %c0_i32, %c0_i32_0 : i32, i32
  }
  func.func @transform_5(%arg0: i32) -> (i32, i32) {
    %c0_i32 = arith.constant 0 : i32
    %c0_i32_0 = arith.constant 0 : i32
    %c0_i32_1 = arith.constant 0 : i32
    return %c0_i32, %c0_i32_0 : i32, i32
  }
  func.func @transform_6(%arg0: i32) -> (i32, i32) {
    %c0_i32 = arith.constant 0 : i32
    %c0_i32_0 = arith.constant 0 : i32
    %c0_i32_1 = arith.constant 0 : i32
    return %c0_i32, %c0_i32_0 : i32, i32
  }
  func.func @transform_7(%arg0: i32) -> (i32, i32) {
    %c0_i32 = arith.constant 0 : i32
    %c0_i32_0 = arith.constant 0 : i32
    return %arg0, %c0_i32 : i32, i32
  }
}

</mosaic_0001>

<llo_original>
// kernel: tpu_custom_call.1
$region0: #{tpu_custom_call.1}
  #allocation0 [shape = 'u32[]', space=smem, size = 0x4, offset = 0x4, fixed_abs, tag = 'smem constant byte address 0x4 - core index']
  #allocation1 [shape = 'u32[144,128]{1,0:T(1,128)}', space=vmem, size = 0x12000, scoped, tag = 'internal scratch']
  %s0 = inlined_call_operand.hbm [shape: f32[16,36], index: 0, kind: input, shape index: {}]
  %s1 = inlined_call_operand.hbm [shape: bf16[36,64], index: 1, kind: input, shape index: {}]
  %s2 = inlined_call_operand.hbm [shape: bf16[36,512], index: 2, kind: input, shape index: {}]
  %s3 = inlined_call_operand.hbm [shape: bf16[64,512], index: 3, kind: input, shape index: {}]
  %s4 = inlined_call_operand.hbm [shape: bf16[512,384], index: 4, kind: input, shape index: {}]
  %s5 = inlined_call_operand.hbm [shape: bf16[256,128], index: 5, kind: input, shape index: {}]
  %s6 = inlined_call_operand.vmem [shape: f32[4,512], index: 6, kind: input, shape index: {}]
  %s7 = inlined_call_operand.hbm [shape: f32[16,128], index: 7, kind: output, shape index: {}]
  %s8 = sld [smem:[#allocation0]]
  $region62: #{tpu_custom_call.1} parent=0
    _
  %s10 = ssub.s32 1, %s8
  %s11 = scalar_select 0, %s10, %s8
  $region1: #{tpu_custom_call.1} parent=0
    #allocation2 [shape = 'u8[8192]{0}', space=vmem, size = 0x2000, scoped, tag = 'input window, operand 0, single buffered']
    #allocation3 [shape = 's32[1]{0}', space=sflag, size = 0x4, scoped, tag = 'scoped memory for tpu_custom_call.1']
    #allocation4 [shape = 's32[1]{0}', space=sflag, size = 0x4, scoped, tag = 'scoped memory for tpu_custom_call.1']
    #allocation5 [shape = 'u8[10240]{0}', space=vmem, size = 0x2800, scoped, tag = 'input window, operand 1, single buffered']
    #allocation6 [shape = 's32[1]{0}', space=sflag, size = 0x4, scoped, tag = 'scoped memory for tpu_custom_call.1']
    #allocation7 [shape = 'u8[40960]{0}', space=vmem, size = 0xa000, scoped, tag = 'input window, operand 2, single buffered']
    #allocation8 [shape = 'u8[65536]{0}', space=vmem, size = 0x10000, scoped, tag = 'input window, operand 3, single buffered']
    #allocation9 [shape = 's32[1]{0}', space=sflag, size = 0x4, scoped, tag = 'scoped memory for tpu_custom_call.1']
    #allocation10 [shape = 'u8[393216]{0}', space=vmem, size = 0x60000, scoped, tag = 'input window, operand 4, single buffered']
    #allocation11 [shape = 'u8[65536]{0}', space=vmem, size = 0x10000, scoped, tag = 'input window, operand 5, single buffered']
    #allocation12 [shape = 's32[1]{0}', space=sflag, size = 0x4, scoped, tag = 'scoped memory for tpu_custom_call.1']
    #allocation13 [shape = 'u8[8192]{0}', space=vmem, size = 0x2000, scoped, tag = 'output window, operand 0, single buffered']
    %12 = vsyncpa [#allocation3], 0
    %13 = vsyncpa [#allocation6], 0
    %14 = vsyncpa [#allocation9], 0
    %15 = vsyncpa [#allocation12], 0
    %16 = vsyncpa [#allocation4], 0
    // Predicated region
    $region2: #{tpu_custom_call.1} parent=1 // pred_check
      _
    $region3: #{tpu_custom_call.1} parent=1 // pred_check_branch
      %18 = sbr.rel (0) target = $region5
    $region4: #{tpu_custom_call.1} parent=1 // pred_region
      %s20 = ssub.s32 256, 256
      %21 = vsyncadd [#allocation3], %s20
      %s22 = sshll.u32 [#allocation2], 4
      %s23 = int_to_ptr.vmem [resolvable:$true] %s22
      %28 = dma.hbm_to_vmem [thread:$0]  %s0, 256, %s23, [#allocation3], 128, 128, 8
    $region5: #{tpu_custom_call.1} parent=1 // pred_fallthru
      _
    // Predicated region
    $region6: #{tpu_custom_call.1} parent=1 // pred_check
      _
    $region7: #{tpu_custom_call.1} parent=1 // pred_check_branch
      %30 = sbr.rel (0) target = $region9
    $region8: #{tpu_custom_call.1} parent=1 // pred_region
      %s32 = ssub.s32 320, 320
      %33 = vsyncadd [#allocation6], %s32
      %s34 = sshll.u32 [#allocation5], 4
      %s35 = int_to_ptr.vmem [resolvable:$true] %s34
      %40 = dma.hbm_to_vmem [thread:$0]  %s1, 320, %s35, [#allocation6], 64, 64, 4
    $region9: #{tpu_custom_call.1} parent=1 // pred_fallthru
      _
    // Predicated region
    $region10: #{tpu_custom_call.1} parent=1 // pred_check
      _
    $region11: #{tpu_custom_call.1} parent=1 // pred_check_branch
      %42 = sbr.rel (0) target = $region13
    $region12: #{tpu_custom_call.1} parent=1 // pred_region
      %s44 = ssub.s32 1280, 1280
      %45 = vsyncadd [#allocation6], %s44
      %s46 = sshll.u32 [#allocation7], 4
      %s47 = int_to_ptr.vmem [resolvable:$true] %s46
      %52 = dma.hbm_to_vmem [thread:$0]  %s2, 1280, %s47, [#allocation6], 256, 256, 16
    $region13: #{tpu_custom_call.1} parent=1 // pred_fallthru
      _
    // Predicated region
    $region14: #{tpu_custom_call.1} parent=1 // pred_check
      _
    $region15: #{tpu_custom_call.1} parent=1 // pred_check_branch
      %54 = sbr.rel (0) target = $region17
    $region16: #{tpu_custom_call.1} parent=1 // pred_region
      %s56 = ssub.s32 2048, 2048
      %57 = vsyncadd [#allocation9], %s56
      %s58 = sshll.u32 [#allocation8], 4
      %s59 = int_to_ptr.vmem [resolvable:$true] %s58
      %64 = dma.hbm_to_vmem [thread:$0]  %s3, 2048, %s59, [#allocation9], 256, 256, 16
    $region17: #{tpu_custom_call.1} parent=1 // pred_fallthru
      _
    // Predicated region
    $region18: #{tpu_custom_call.1} parent=1 // pred_check
      _
    $region19: #{tpu_custom_call.1} parent=1 // pred_check_branch
      %66 = sbr.rel (0) target = $region21
    $region20: #{tpu_custom_call.1} parent=1 // pred_region
      %s68 = ssub.s32 12288, 12288
      %69 = vsyncadd [#allocation9], %s68
      %s70 = sshll.u32 [#allocation10], 4
      %s71 = int_to_ptr.vmem [resolvable:$true] %s70
      %76 = dma.hbm_to_vmem [thread:$0]  %s4, 12288, %s71, [#allocation9], 192, 192, 12
    $region21: #{tpu_custom_call.1} parent=1 // pred_fallthru
      _
    // Predicated region
    $region22: #{tpu_custom_call.1} parent=1 // pred_check
      _
    $region23: #{tpu_custom_call.1} parent=1 // pred_check_branch
      %78 = sbr.rel (0) target = $region25
    $region24: #{tpu_custom_call.1} parent=1 // pred_region
      %s80 = ssub.s32 2048, 2048
      %81 = vsyncadd [#allocation12], %s80
      %s82 = sshll.u32 [#allocation11], 4
      %s83 = int_to_ptr.vmem [resolvable:$true] %s82
      %88 = dma.hbm_to_vmem [thread:$0]  %s5, 2048, %s83, [#allocation12], 64, 64, 4
    $region25: #{tpu_custom_call.1} parent=1 // pred_fallthru
      _
    // Predicated region
    $region26: #{tpu_custom_call.1} parent=1 // pred_check
      _
    $region27: #{tpu_custom_call.1} parent=1 // pred_check_branch
      %90 = sbr.rel (0) target = $region29
    $region28: #{tpu_custom_call.1} parent=1 // pred_region
      _
    $region29: #{tpu_custom_call.1} parent=1 // pred_fallthru
      _
    // Predicated region
    $region30: #{tpu_custom_call.1} parent=1 // pred_check
      _
    $region31: #{tpu_custom_call.1} parent=1 // pred_check_branch
      %92 = sbr.rel (0) target = $region33
    $region32: #{tpu_custom_call.1} parent=1 // pred_region
      %93 = dma.done [#allocation3], 256
    $region33: #{tpu_custom_call.1} parent=1 // pred_fallthru
      _
    // Predicated region
    $region34: #{tpu_custom_call.1} parent=1 // pred_check
      _
    $region35: #{tpu_custom_call.1} parent=1 // pred_check_branch
      %95 = sbr.rel (0) target = $region37
    $region36: #{tpu_custom_call.1} parent=1 // pred_region
      %96 = dma.done [#allocation6], 320
    $region37: #{tpu_custom_call.1} parent=1 // pred_fallthru
      _
    // Predicated region
    $region38: #{tpu_custom_call.1} parent=1 // pred_check
      _
    $region39: #{tpu_custom_call.1} parent=1 // pred_check_branch
      %98 = sbr.rel (0) target = $region41
    $region40: #{tpu_custom_call.1} parent=1 // pred_region
      %99 = dma.done [#allocation6], 1280
    $region41: #{tpu_custom_call.1} parent=1 // pred_fallthru
      _
    // Predicated region
    $region42: #{tpu_custom_call.1} parent=1 // pred_check
      _
    $region43: #{tpu_custom_call.1} parent=1 // pred_check_branch
      %101 = sbr.rel (0) target = $region45
    $region44: #{tpu_custom_call.1} parent=1 // pred_region
      %102 = dma.done [#allocation9], 2048
    $region45: #{tpu_custom_call.1} parent=1 // pred_fallthru
      _
    // Predicated region
    $region46: #{tpu_custom_call.1} parent=1 // pred_check
      _
    $region47: #{tpu_custom_call.1} parent=1 // pred_check_branch
      %104 = sbr.rel (0) target = $region49
    $region48: #{tpu_custom_call.1} parent=1 // pred_region
      %105 = dma.done [#allocation9], 12288
    $region49: #{tpu_custom_call.1} parent=1 // pred_fallthru
      _
    // Predicated region
    $region50: #{tpu_custom_call.1} parent=1 // pred_check
      _
    $region51: #{tpu_custom_call.1} parent=1 // pred_check_branch
      %107 = sbr.rel (0) target = $region53
    $region52: #{tpu_custom_call.1} parent=1 // pred_region
      %108 = dma.done [#allocation12], 2048
    $region53: #{tpu_custom_call.1} parent=1 // pred_fallthru
      _
    %v110 = vld [vmem:[#allocation2] sm:$0xff]
    %v111 = vld [vmem:[#allocation2 + $0x8] sm:$0xff]
    %v112 = vpack.c.bf16 %v111, %v110
    %v113 = vld [vmem:[#allocation5] sm:$0xf]
    %v114 = vld [vmem:[#allocation5 + $0x4] sm:$0xf]
    %v115 = vld [vmem:[#allocation5 + $0x8] sm:$0xf]
    %v116 = vld [vmem:[#allocation5 + $0xc] sm:$0xf]
    %v117 = vld [vmem:[#allocation5 + $0x10] sm:$0x3]
    %v118 = vld [vmem:[%s6] sm:$0x1]
    %v119 = vlaneseq
    %v120 = vshrl.u32 %v119, 7
    %v121 = vsub.s32 0, %v120
    %v122 = vrot.slane %v118, %v121
    %v128 = vunpack.c.l.b16 %v113
    %v129 = vunpack.c.l.b16 %v114
    %v130 = vunpack.c.l.b16 %v115
    %v131 = vunpack.c.l.b16 %v116
    %v132 = vunpack.c.l.b16 %v117
    %v133 = vpack.c.b16 %v129, %v128
    %v134 = vpack.c.b16 %v131, %v130
    %v135 = vpack.c.b16 %v132, %v132
    %vm138 = vcmask 293888
    %v140 = vsel %vm138, %v112, 0
    %vm142 = vcmask 1041408
    %v144 = vsel %vm142, %v135, 0
    %146 = vmatprep.subr.bf16.mxu0 0
    %147 = vmatpush1.bf16.msra.mxu0 %v133
    %148 = vmatprep.subr.bf16.mxu0 0
    %149 = vmatpush1.bf16.msra.mxu0 %v134
    %150 = vmatprep.subr.bf16.mxu0 0
    %151 = vmatpush1.bf16.msra.mxu0 %v144
    %152 = vmatprep.subr.bf16.mxu0 0
    %153 = vmatpush1.bf16.msra.mxu0 0
    %154 = vmatprep.subr.bf16.mxu0 0
    %155 = vmatpush1.bf16.msra.mxu0 0
    %156 = vmatprep.subr.bf16.mxu0 0
    %157 = vmatpush1.bf16.msra.mxu0 0
    %158 = vmatprep.subr.bf16.mxu0 0
    %159 = vmatpush1.bf16.msra.mxu0 0
    %160 = vmatprep.subr.bf16.mxu0 0
    %161 = vmatpush1.bf16.msra.mxu0 0
    %162 = vmatprep.subr.bf16.mxu0 0
    %163 = vmatpush1.bf16.msra.mxu0 0
    %164 = vmatprep.subr.bf16.mxu0 0
    %165 = vmatpush1.bf16.msra.mxu0 0
    %166 = vmatprep.subr.bf16.mxu0 0
    %167 = vmatpush1.bf16.msra.mxu0 0
    %168 = vmatprep.subr.bf16.mxu0 0
    %169 = vmatpush1.bf16.msra.mxu0 0
    %170 = vmatprep.subr.bf16.mxu0 0
    %171 = vmatpush1.bf16.msra.mxu0 0
    %172 = vmatprep.subr.bf16.mxu0 0
    %173 = vmatpush1.bf16.msra.mxu0 0
    %174 = vmatprep.subr.bf16.mxu0 0
    %175 = vmatpush1.bf16.msra.mxu0 0
    %176 = vmatprep.subr.bf16.mxu0 0
    %177 = vmatpush1.bf16.msra.mxu0 0
    %178 = vmatprep.mubr.bf16.mxu0 0
    %179 = vmatmul.mubr.bf16.gmra.mrb[0].mxu0 %v140
    %v180 = vpop.f32.mrb[0].mxu0
    %v181 = vadd.f32 %v122, %v180
    %v182 = vpop.f32.mrb[0].mxu0
    %v183 = vpop.f32.mrb[0].mxu0
    %v184 = vadd.f32 %v122, %v183
    %v185 = vpop.f32.mrb[0].mxu0
    %186 = vdwg.mxu0
    %v187 = vmax.f32 %v181, 0.0
    %v188 = vmax.f32 %v184, 0.0
    %v189 = vld [vmem:[#allocation7] sm:$0xff]
    %v190 = vld [vmem:[#allocation7 + $0x8] sm:$0xff]
    %v191 = vld [vmem:[#allocation7 + $0x10] sm:$0xff]
    %v192 = vld [vmem:[#allocation7 + $0x18] sm:$0xff]
    %v193 = vld [vmem:[#allocation7 + $0x20] sm:$0xff]
    %v194 = vld [vmem:[#allocation7 + $0x28] sm:$0xff]
    %v195 = vld [vmem:[#allocation7 + $0x30] sm:$0xff]
    %v196 = vld [vmem:[#allocation7 + $0x38] sm:$0xff]
    %v197 = vld [vmem:[#allocation7 + $0x40] sm:$0x33]
    %v198 = vld [vmem:[#allocation7 + $0x48] sm:$0x33]
    %v199 = vpack.c.bf16 %v188, %v187
    %v200 = vld [vmem:[#allocation8] sm:$0xff]
    %v201 = vld [vmem:[#allocation8 + $0x8] sm:$0xff]
    %v202 = vld [vmem:[#allocation8 + $0x10] sm:$0xff]
    %v203 = vld [vmem:[#allocation8 + $0x18] sm:$0xff]
    %v204 = vld [vmem:[#allocation8 + $0x20] sm:$0xff]
    %v205 = vld [vmem:[#allocation8 + $0x28] sm:$0xff]
    %v206 = vld [vmem:[#allocation8 + $0x30] sm:$0xff]
    %v207 = vld [vmem:[#allocation8 + $0x38] sm:$0xff]
    %v208 = vld [vmem:[#allocation8 + $0x40] sm:$0xff]
    %v209 = vld [vmem:[#allocation8 + $0x48] sm:$0xff]
    %v210 = vld [vmem:[#allocation8 + $0x50] sm:$0xff]
    %v211 = vld [vmem:[#allocation8 + $0x58] sm:$0xff]
    %v212 = vld [vmem:[#allocation8 + $0x60] sm:$0xff]
    %v213 = vld [vmem:[#allocation8 + $0x68] sm:$0xff]
    %v214 = vld [vmem:[#allocation8 + $0x70] sm:$0xff]
    %v215 = vld [vmem:[#allocation8 + $0x78] sm:$0xff]
    %v232 = vunpack.c.l.b16 %v200
    %v233 = vunpack.c.h.b16 %v200
    %v234 = vunpack.c.l.b16 %v201
    %v235 = vunpack.c.h.b16 %v201
    %v236 = vunpack.c.l.b16 %v202
    %v237 = vunpack.c.h.b16 %v202
    %v238 = vunpack.c.l.b16 %v203
    %v239 = vunpack.c.h.b16 %v203
    %v240 = vunpack.c.l.b16 %v204
    %v241 = vunpack.c.h.b16 %v204
    %v242 = vunpack.c.l.b16 %v205
    %v243 = vunpack.c.h.b16 %v205
    %v244 = vunpack.c.l.b16 %v206
    %v245 = vunpack.c.h.b16 %v206
    %v246 = vunpack.c.l.b16 %v207
    %v247 = vunpack.c.h.b16 %v207
    %v248 = vunpack.c.l.b16 %v208
    %v249 = vunpack.c.h.b16 %v208
    %v250 = vunpack.c.l.b16 %v209
    %v251 = vunpack.c.h.b16 %v209
    %v252 = vunpack.c.l.b16 %v210
    %v253 = vunpack.c.h.b16 %v210
    %v254 = vunpack.c.l.b16 %v211
    %v255 = vunpack.c.h.b16 %v211
    %v256 = vunpack.c.l.b16 %v212
    %v257 = vunpack.c.h.b16 %v212
    %v258 = vunpack.c.l.b16 %v213
    %v259 = vunpack.c.h.b16 %v213
    %v260 = vunpack.c.l.b16 %v214
    %v261 = vunpack.c.h.b16 %v214
    %v262 = vunpack.c.l.b16 %v215
    %v263 = vunpack.c.h.b16 %v215
    %v264 = vpack.c.b16 %v236, %v232
    %v265 = vpack.c.b16 %v237, %v233
    %v266 = vpack.c.b16 %v238, %v234
    %v267 = vpack.c.b16 %v239, %v235
    %v268 = vpack.c.b16 %v244, %v240
    %v269 = vpack.c.b16 %v245, %v241
    %v270 = vpack.c.b16 %v246, %v242
    %v271 = vpack.c.b16 %v247, %v243
    %v272 = vpack.c.b16 %v252, %v248
    %v273 = vpack.c.b16 %v253, %v249
    %v274 = vpack.c.b16 %v254, %v250
    %v275 = vpack.c.b16 %v255, %v251
    %v276 = vpack.c.b16 %v260, %v256
    %v277 = vpack.c.b16 %v261, %v257
    %v278 = vpack.c.b16 %v262, %v258
    %v279 = vpack.c.b16 %v263, %v259
    %vm296 = vcmask 523264
    %v298 = vsel %vm296, %v199, 0
    %300 = vmatprep.subr.bf16.mxu0 %v265
    %301 = vmatpush1.bf16.msra.mxu0 %v264
    %302 = vmatprep.subr.bf16.mxu0 %v269
    %303 = vmatpush1.bf16.msra.mxu0 %v268
    %304 = vmatprep.subr.bf16.mxu0 %v273
    %305 = vmatpush1.bf16.msra.mxu0 %v272
    %306 = vmatprep.subr.bf16.mxu0 %v277
    %307 = vmatpush1.bf16.msra.mxu0 %v276
    %308 = vmatprep.subr.bf16.mxu0 0
    %309 = vmatpush1.bf16.msra.mxu0 0
    %310 = vmatprep.subr.bf16.mxu0 0
    %311 = vmatpush1.bf16.msra.mxu0 0
    %312 = vmatprep.subr.bf16.mxu0 0
    %313 = vmatpush1.bf16.msra.mxu0 0
    %314 = vmatprep.subr.bf16.mxu0 0
    %315 = vmatpush1.bf16.msra.mxu0 0
    %316 = vmatprep.subr.bf16.mxu0 0
    %317 = vmatpush1.bf16.msra.mxu0 0
    %318 = vmatprep.subr.bf16.mxu0 0
    %319 = vmatpush1.bf16.msra.mxu0 0
    %320 = vmatprep.subr.bf16.mxu0 0
    %321 = vmatpush1.bf16.msra.mxu0 0
    %322 = vmatprep.subr.bf16.mxu0 0
    %323 = vmatpush1.bf16.msra.mxu0 0
    %324 = vmatprep.subr.bf16.mxu0 0
    %325 = vmatpush1.bf16.msra.mxu0 0
    %326 = vmatprep.subr.bf16.mxu0 0
    %327 = vmatpush1.bf16.msra.mxu0 0
    %328 = vmatprep.subr.bf16.mxu0 0
    %329 = vmatpush1.bf16.msra.mxu0 0
    %330 = vmatprep.subr.bf16.mxu0 0
    %331 = vmatpush1.bf16.msra.mxu0 0
    %332 = vmatprep.mubr.bf16.mxu0 0
    %333 = vmatmul.mubr.bf16.gmra.mrb[0].mxu0 %v298
    %v334 = vpop.f32.mrb[0].mxu0
    %v335 = vadd.f32 0.0, %v334
    %v336 = vpop.f32.mrb[0].mxu0
    %v337 = vadd.f32 0.0, %v336
    %v338 = vpop.f32.mrb[0].mxu0
    %v339 = vadd.f32 0.0, %v338
    %v340 = vpop.f32.mrb[0].mxu0
    %v341 = vadd.f32 0.0, %v340
    %342 = vdwg.mxu0
    %343 = vmatprep.subr.bf16.mxu0 %v267
    %344 = vmatpush1.bf16.msra.mxu0 %v266
    %345 = vmatprep.subr.bf16.mxu0 %v271
    %346 = vmatpush1.bf16.msra.mxu0 %v270
    %347 = vmatprep.subr.bf16.mxu0 %v275
    %348 = vmatpush1.bf16.msra.mxu0 %v274
    %349 = vmatprep.subr.bf16.mxu0 %v279
    %350 = vmatpush1.bf16.msra.mxu0 %v278
    %351 = vmatprep.subr.bf16.mxu0 0
    %352 = vmatpush1.bf16.msra.mxu0 0
    %353 = vmatprep.subr.bf16.mxu0 0
    %354 = vmatpush1.bf16.msra.mxu0 0
    %355 = vmatprep.subr.bf16.mxu0 0
    %356 = vmatpush1.bf16.msra.mxu0 0
    %357 = vmatprep.subr.bf16.mxu0 0
    %358 = vmatpush1.bf16.msra.mxu0 0
    %359 = vmatprep.subr.bf16.mxu0 0
    %360 = vmatpush1.bf16.msra.mxu0 0
    %361 = vmatprep.subr.bf16.mxu0 0
    %362 = vmatpush1.bf16.msra.mxu0 0
    %363 = vmatprep.subr.bf16.mxu0 0
    %364 = vmatpush1.bf16.msra.mxu0 0
    %365 = vmatprep.subr.bf16.mxu0 0
    %366 = vmatpush1.bf16.msra.mxu0 0
    %367 = vmatprep.subr.bf16.mxu0 0
    %368 = vmatpush1.bf16.msra.mxu0 0
    %369 = vmatprep.subr.bf16.mxu0 0
    %370 = vmatpush1.bf16.msra.mxu0 0
    %371 = vmatprep.subr.bf16.mxu0 0
    %372 = vmatpush1.bf16.msra.mxu0 0
    %373 = vmatprep.subr.bf16.mxu0 0
    %374 = vmatpush1.bf16.msra.mxu0 0
    %375 = vmatprep.mubr.bf16.mxu0 0
    %376 = vmatmul.mubr.bf16.gmra.mrb[0].mxu0 %v298
    %v377 = vpop.f32.mrb[0].mxu0
    %v378 = vadd.f32 0.0, %v377
    %v379 = vpop.f32.mrb[0].mxu0
    %v380 = vadd.f32 0.0, %v379
    %v381 = vpop.f32.mrb[0].mxu0
    %v382 = vadd.f32 0.0, %v381
    %v383 = vpop.f32.mrb[0].mxu0
    %v384 = vadd.f32 0.0, %v383
    %385 = vdwg.mxu0
    %v396 = vunpack.c.l.b16 %v189
    %v397 = vunpack.c.h.b16 %v189
    %v398 = vunpack.c.l.b16 %v190
    %v399 = vunpack.c.h.b16 %v190
    %v400 = vunpack.c.l.b16 %v191
    %v401 = vunpack.c.h.b16 %v191
    %v402 = vunpack.c.l.b16 %v192
    %v403 = vunpack.c.h.b16 %v192
    %v404 = vunpack.c.l.b16 %v193
    %v405 = vunpack.c.h.b16 %v193
    %v406 = vunpack.c.l.b16 %v194
    %v407 = vunpack.c.h.b16 %v194
    %v408 = vunpack.c.l.b16 %v195
    %v409 = vunpack.c.h.b16 %v195
    %v410 = vunpack.c.l.b16 %v196
    %v411 = vunpack.c.h.b16 %v196
    %v412 = vunpack.c.l.b16 %v197
    %v413 = vunpack.c.h.b16 %v197
    %v414 = vunpack.c.l.b16 %v198
    %v415 = vunpack.c.h.b16 %v198
    %v416 = vpack.c.b16 %v400, %v396
    %v417 = vpack.c.b16 %v401, %v397
    %v418 = vpack.c.b16 %v402, %v398
    %v419 = vpack.c.b16 %v403, %v399
    %v420 = vpack.c.b16 %v408, %v404
    %v421 = vpack.c.b16 %v409, %v405
    %v422 = vpack.c.b16 %v410, %v406
    %v423 = vpack.c.b16 %v411, %v407
    %v424 = vpack.c.b16 %v412, %v412
    %v425 = vpack.c.b16 %v413, %v413
    %v426 = vpack.c.b16 %v414, %v414
    %v427 = vpack.c.b16 %v415, %v415
    %v437 = vsel %vm142, %v424, 0
    %v440 = vsel %vm142, %v425, 0
    %v443 = vsel %vm142, %v426, 0
    %v446 = vsel %vm142, %v427, 0
    %448 = vmatprep.subr.bf16.mxu0 %v417
    %449 = vmatpush1.bf16.msra.mxu0 %v416
    %450 = vmatprep.subr.bf16.mxu0 %v421
    %451 = vmatpush1.bf16.msra.mxu0 %v420
    %452 = vmatprep.subr.bf16.mxu0 %v440
    %453 = vmatpush1.bf16.msra.mxu0 %v437
    %454 = vmatprep.subr.bf16.mxu0 0
    %455 = vmatpush1.bf16.msra.mxu0 0
    %456 = vmatprep.subr.bf16.mxu0 0
    %457 = vmatpush1.bf16.msra.mxu0 0
    %458 = vmatprep.subr.bf16.mxu0 0
    %459 = vmatpush1.bf16.msra.mxu0 0
    %460 = vmatprep.subr.bf16.mxu0 0
    %461 = vmatpush1.bf16.msra.mxu0 0
    %462 = vmatprep.subr.bf16.mxu0 0
    %463 = vmatpush1.bf16.msra.mxu0 0
    %464 = vmatprep.subr.bf16.mxu0 0
    %465 = vmatpush1.bf16.msra.mxu0 0
    %466 = vmatprep.subr.bf16.mxu0 0
    %467 = vmatpush1.bf16.msra.mxu0 0
    %468 = vmatprep.subr.bf16.mxu0 0
    %469 = vmatpush1.bf16.msra.mxu0 0
    %470 = vmatprep.subr.bf16.mxu0 0
    %471 = vmatpush1.bf16.msra.mxu0 0
    %472 = vmatprep.subr.bf16.mxu0 0
    %473 = vmatpush1.bf16.msra.mxu0 0
    %474 = vmatprep.subr.bf16.mxu0 0
    %475 = vmatpush1.bf16.msra.mxu0 0
    %476 = vmatprep.subr.bf16.mxu0 0
    %477 = vmatpush1.bf16.msra.mxu0 0
    %478 = vmatprep.subr.bf16.mxu0 0
    %479 = vmatpush1.bf16.msra.mxu0 0
    %480 = vmatprep.mubr.bf16.mxu0 0
    %481 = vmatmul.mubr.bf16.gmra.mrb[0].mxu0 %v140
    %v482 = vpop.f32.mrb[0].mxu0
    %v483 = vadd.f32 %v335, %v482
    %v484 = vpop.f32.mrb[0].mxu0
    %v485 = vadd.f32 %v337, %v484
    %v486 = vpop.f32.mrb[0].mxu0
    %v487 = vadd.f32 %v339, %v486
    %v488 = vpop.f32.mrb[0].mxu0
    %v489 = vadd.f32 %v341, %v488
    %490 = vdwg.mxu0
    %491 = vmatprep.subr.bf16.mxu0 %v419
    %492 = vmatpush1.bf16.msra.mxu0 %v418
    %493 = vmatprep.subr.bf16.mxu0 %v423
    %494 = vmatpush1.bf16.msra.mxu0 %v422
    %495 = vmatprep.subr.bf16.mxu0 %v446
    %496 = vmatpush1.bf16.msra.mxu0 %v443
    %497 = vmatprep.subr.bf16.mxu0 0
    %498 = vmatpush1.bf16.msra.mxu0 0
    %499 = vmatprep.subr.bf16.mxu0 0
    %500 = vmatpush1.bf16.msra.mxu0 0
    %501 = vmatprep.subr.bf16.mxu0 0
    %502 = vmatpush1.bf16.msra.mxu0 0
    %503 = vmatprep.subr.bf16.mxu0 0
    %504 = vmatpush1.bf16.msra.mxu0 0
    %505 = vmatprep.subr.bf16.mxu0 0
    %506 = vmatpush1.bf16.msra.mxu0 0
    %507 = vmatprep.subr.bf16.mxu0 0
    %508 = vmatpush1.bf16.msra.mxu0 0
    %509 = vmatprep.subr.bf16.mxu0 0
    %510 = vmatpush1.bf16.msra.mxu0 0
    %511 = vmatprep.subr.bf16.mxu0 0
    %512 = vmatpush1.bf16.msra.mxu0 0
    %513 = vmatprep.subr.bf16.mxu0 0
    %514 = vmatpush1.bf16.msra.mxu0 0
    %515 = vmatprep.subr.bf16.mxu0 0
    %516 = vmatpush1.bf16.msra.mxu0 0
    %517 = vmatprep.subr.bf16.mxu0 0
    %518 = vmatpush1.bf16.msra.mxu0 0
    %519 = vmatprep.subr.bf16.mxu0 0
    %520 = vmatpush1.bf16.msra.mxu0 0
    %521 = vmatprep.subr.bf16.mxu0 0
    %522 = vmatpush1.bf16.msra.mxu0 0
    %523 = vmatprep.mubr.bf16.mxu0 0
    %524 = vmatmul.mubr.bf16.gmra.mrb[0].mxu0 %v140
    %v525 = vpop.f32.mrb[0].mxu0
    %v526 = vadd.f32 %v378, %v525
    %v527 = vpop.f32.mrb[0].mxu0
    %v528 = vadd.f32 %v380, %v527
    %v529 = vpop.f32.mrb[0].mxu0
    %v530 = vadd.f32 %v382, %v529
    %v531 = vpop.f32.mrb[0].mxu0
    %v532 = vadd.f32 %v384, %v531
    %533 = vdwg.mxu0
    %s534 = scalar_lea.vmem %s6, 1
    %v535 = vld [vmem:[%s534] ss:$4 sm:$0xf]
    %v537 = vlaneseq
    %v538 = vshrl.u32 %v537, 7
    %v539 = vsub.s32 0, %v538
    %v540 = vrot.slane %v535, %v539
    %v541 = vlaneseq
    %v542 = vshrl.u32 %v541, 7
    %v543 = vsub.s32 1, %v542
    %v544 = vrot.slane %v535, %v543
    %v545 = vlaneseq
    %v546 = vshrl.u32 %v545, 7
    %v547 = vsub.s32 2, %v546
    %v548 = vrot.slane %v535, %v547
    %v549 = vlaneseq
    %v550 = vshrl.u32 %v549, 7
    %v551 = vsub.s32 3, %v550
    %v552 = vrot.slane %v535, %v551
    %v557 = vadd.f32 %v483, %v540
    %v558 = vadd.f32 %v485, %v544
    %v559 = vadd.f32 %v526, %v548
    %v560 = vadd.f32 %v528, %v552
    %v561 = vadd.f32 %v487, %v540
    %v562 = vadd.f32 %v489, %v544
    %v563 = vadd.f32 %v530, %v548
    %v564 = vadd.f32 %v532, %v552
    %v565 = vmax.f32 %v557, 0.0
    %v566 = vmax.f32 %v558, 0.0
    %v567 = vmax.f32 %v559, 0.0
    %v568 = vmax.f32 %v560, 0.0
    %v569 = vmax.f32 %v561, 0.0
    %v570 = vmax.f32 %v562, 0.0
    %v571 = vmax.f32 %v563, 0.0
    %v572 = vmax.f32 %v564, 0.0
    %v573 = vpack.c.bf16 %v569, %v565
    %v574 = vpack.c.bf16 %v570, %v566
    %v575 = vpack.c.bf16 %v571, %v567
    %v576 = vpack.c.bf16 %v572, %v568
    %v577 = vld [vmem:[#allocation10] sm:$0xff]
    %v578 = vld [vmem:[#allocation10 + $0x8] sm:$0xf]
    %v579 = vld [vmem:[#allocation10 + $0xc] sm:$0xff]
    %v580 = vld [vmem:[#allocation10 + $0x14] sm:$0xf]
    %v581 = vld [vmem:[#allocation10 + $0x18] sm:$0xff]
    %v582 = vld [vmem:[#allocation10 + $0x20] sm:$0xf]
    %v583 = vld [vmem:[#allocation10 + $0x24] sm:$0xff]
    %v584 = vld [vmem:[#allocation10 + $0x2c] sm:$0xf]
    %v585 = vld [vmem:[#allocation10 + $0x30] sm:$0xff]
    %v586 = vld [vmem:[#allocation10 + $0x38] sm:$0xf]
    %v587 = vld [vmem:[#allocation10 + $0x3c] sm:$0xff]
    %v588 = vld [vmem:[#allocation10 + $0x44] sm:$0xf]
    %v589 = vld [vmem:[#allocation10 + $0x48] sm:$0xff]
    %v590 = vld [vmem:[#allocation10 + $0x50] sm:$0xf]
    %v591 = vld [vmem:[#allocation10 + $0x54] sm:$0xff]
    %v592 = vld [vmem:[#allocation10 + $0x5c] sm:$0xf]
    %v593 = vld [vmem:[#allocation10 + $0x60] sm:$0xff]
    %v594 = vld [vmem:[#allocation10 + $0x68] sm:$0xf]
    %v595 = vld [vmem:[#allocation10 + $0x6c] sm:$0xff]
    %v596 = vld [vmem:[#allocation10 + $0x74] sm:$0xf]
    %v597 = vld [vmem:[#allocation10 + $0x78] sm:$0xff]
    %v598 = vld [vmem:[#allocation10 + $0x80] sm:$0xf]
    %v599 = vld [vmem:[#allocation10 + $0x84] sm:$0xff]
    %v600 = vld [vmem:[#allocation10 + $0x8c] sm:$0xf]
    %v601 = vld [vmem:[#allocation10 + $0x90] sm:$0xff]
    %v602 = vld [vmem:[#allocation10 + $0x98] sm:$0xf]
    %v603 = vld [vmem:[#allocation10 + $0x9c] sm:$0xff]
    %v604 = vld [vmem:[#allocation10 + $0xa4] sm:$0xf]
    %v605 = vld [vmem:[#allocation10 + $0xa8] sm:$0xff]
    %v606 = vld [vmem:[#allocation10 + $0xb0] sm:$0xf]
    %v607 = vld [vmem:[#allocation10 + $0xb4] sm:$0xff]
    %v608 = vld [vmem:[#allocation10 + $0xbc] sm:$0xf]
    %v609 = vld [vmem:[#allocation10 + $0xc0] sm:$0xff]
    %v610 = vld [vmem:[#allocation10 + $0xc8] sm:$0xf]
    %v611 = vld [vmem:[#allocation10 + $0xcc] sm:$0xff]
    %v612 = vld [vmem:[#allocation10 + $0xd4] sm:$0xf]
    %v613 = vld [vmem:[#allocation10 + $0xd8] sm:$0xff]
    %v614 = vld [vmem:[#allocation10 + $0xe0] sm:$0xf]
    %v615 = vld [vmem:[#allocation10 + $0xe4] sm:$0xff]
    %v616 = vld [vmem:[#allocation10 + $0xec] sm:$0xf]
    %v617 = vld [vmem:[#allocation10 + $0xf0] sm:$0xff]
    %v618 = vld [vmem:[#allocation10 + $0xf8] sm:$0xf]
    %v619 = vld [vmem:[#allocation10 + $0xfc] sm:$0xff]
    %v620 = vld [vmem:[#allocation10 + $0x104] sm:$0xf]
    %v621 = vld [vmem:[#allocation10 + $0x108] sm:$0xff]
    %v622 = vld [vmem:[#allocation10 + $0x110] sm:$0xf]
    %v623 = vld [vmem:[#allocation10 + $0x114] sm:$0xff]
    %v624 = vld [vmem:[#allocation10 + $0x11c] sm:$0xf]
    %v625 = vld [vmem:[#allocation10 + $0x120] sm:$0xff]
    %v626 = vld [vmem:[#allocation10 + $0x128] sm:$0xf]
    %v627 = vld [vmem:[#allocation10 + $0x12c] sm:$0xff]
    %v628 = vld [vmem:[#allocation10 + $0x134] sm:$0xf]
    %v629 = vld [vmem:[#allocation10 + $0x138] sm:$0xff]
    %v630 = vld [vmem:[#allocation10 + $0x140] sm:$0xf]
    %v631 = vld [vmem:[#allocation10 + $0x144] sm:$0xff]
    %v632 = vld [vmem:[#allocation10 + $0x14c] sm:$0xf]
    %v633 = vld [vmem:[#allocation10 + $0x150] sm:$0xff]
    %v634 = vld [vmem:[#allocation10 + $0x158] sm:$0xf]
    %v635 = vld [vmem:[#allocation10 + $0x15c] sm:$0xff]
    %v636 = vld [vmem:[#allocation10 + $0x164] sm:$0xf]
    %v637 = vld [vmem:[#allocation10 + $0x168] sm:$0xff]
    %v638 = vld [vmem:[#allocation10 + $0x170] sm:$0xf]
    %v639 = vld [vmem:[#allocation10 + $0x174] sm:$0xff]
    %v640 = vld [vmem:[#allocation10 + $0x17c] sm:$0xf]
    %v641 = vld [vmem:[#allocation10 + $0x180] sm:$0xff]
    %v642 = vld [vmem:[#allocation10 + $0x188] sm:$0xf]
    %v643 = vld [vmem:[#allocation10 + $0x18c] sm:$0xff]
    %v644 = vld [vmem:[#allocation10 + $0x194] sm:$0xf]
    %v645 = vld [vmem:[#allocation10 + $0x198] sm:$0xff]
    %v646 = vld [vmem:[#allocation10 + $0x1a0] sm:$0xf]
    %v647 = vld [vmem:[#allocation10 + $0x1a4] sm:$0xff]
    %v648 = vld [vmem:[#allocation10 + $0x1ac] sm:$0xf]
    %v649 = vld [vmem:[#allocation10 + $0x1b0] sm:$0xff]
    %v650 = vld [vmem:[#allocation10 + $0x1b8] sm:$0xf]
    %v651 = vld [vmem:[#allocation10 + $0x1bc] sm:$0xff]
    %v652 = vld [vmem:[#allocation10 + $0x1c4] sm:$0xf]
    %v653 = vld [vmem:[#allocation10 + $0x1c8] sm:$0xff]
    %v654 = vld [vmem:[#allocation10 + $0x1d0] sm:$0xf]
    %v655 = vld [vmem:[#allocation10 + $0x1d4] sm:$0xff]
    %v656 = vld [vmem:[#allocation10 + $0x1dc] sm:$0xf]
    %v657 = vld [vmem:[#allocation10 + $0x1e0] sm:$0xff]
    %v658 = vld [vmem:[#allocation10 + $0x1e8] sm:$0xf]
    %v659 = vld [vmem:[#allocation10 + $0x1ec] sm:$0xff]
    %v660 = vld [vmem:[#allocation10 + $0x1f4] sm:$0xf]
    %v661 = vld [vmem:[#allocation10 + $0x1f8] sm:$0xff]
    %v662 = vld [vmem:[#allocation10 + $0x200] sm:$0xf]
    %v663 = vld [vmem:[#allocation10 + $0x204] sm:$0xff]
    %v664 = vld [vmem:[#allocation10 + $0x20c] sm:$0xf]
    %v665 = vld [vmem:[#allocation10 + $0x210] sm:$0xff]
    %v666 = vld [vmem:[#allocation10 + $0x218] sm:$0xf]
    %v667 = vld [vmem:[#allocation10 + $0x21c] sm:$0xff]
    %v668 = vld [vmem:[#allocation10 + $0x224] sm:$0xf]
    %v669 = vld [vmem:[#allocation10 + $0x228] sm:$0xff]
    %v670 = vld [vmem:[#allocation10 + $0x230] sm:$0xf]
    %v671 = vld [vmem:[#allocation10 + $0x234] sm:$0xff]
    %v672 = vld [vmem:[#allocation10 + $0x23c] sm:$0xf]
    %v673 = vld [vmem:[#allocation10 + $0x240] sm:$0xff]
    %v674 = vld [vmem:[#allocation10 + $0x248] sm:$0xf]
    %v675 = vld [vmem:[#allocation10 + $0x24c] sm:$0xff]
    %v676 = vld [vmem:[#allocation10 + $0x254] sm:$0xf]
    %v677 = vld [vmem:[#allocation10 + $0x258] sm:$0xff]
    %v678 = vld [vmem:[#allocation10 + $0x260] sm:$0xf]
    %v679 = vld [vmem:[#allocation10 + $0x264] sm:$0xff]
    %v680 = vld [vmem:[#allocation10 + $0x26c] sm:$0xf]
    %v681 = vld [vmem:[#allocation10 + $0x270] sm:$0xff]
    %v682 = vld [vmem:[#allocation10 + $0x278] sm:$0xf]
    %v683 = vld [vmem:[#allocation10 + $0x27c] sm:$0xff]
    %v684 = vld [vmem:[#allocation10 + $0x284] sm:$0xf]
    %v685 = vld [vmem:[#allocation10 + $0x288] sm:$0xff]
    %v686 = vld [vmem:[#allocation10 + $0x290] sm:$0xf]
    %v687 = vld [vmem:[#allocation10 + $0x294] sm:$0xff]
    %v688 = vld [vmem:[#allocation10 + $0x29c] sm:$0xf]
    %v689 = vld [vmem:[#allocation10 + $0x2a0] sm:$0xff]
    %v690 = vld [vmem:[#allocation10 + $0x2a8] sm:$0xf]
    %v691 = vld [vmem:[#allocation10 + $0x2ac] sm:$0xff]
    %v692 = vld [vmem:[#allocation10 + $0x2b4] sm:$0xf]
    %v693 = vld [vmem:[#allocation10 + $0x2b8] sm:$0xff]
    %v694 = vld [vmem:[#allocation10 + $0x2c0] sm:$0xf]
    %v695 = vld [vmem:[#allocation10 + $0x2c4] sm:$0xff]
    %v696 = vld [vmem:[#allocation10 + $0x2cc] sm:$0xf]
    %v697 = vld [vmem:[#allocation10 + $0x2d0] sm:$0xff]
    %v698 = vld [vmem:[#allocation10 + $0x2d8] sm:$0xf]
    %v699 = vld [vmem:[#allocation10 + $0x2dc] sm:$0xff]
    %v700 = vld [vmem:[#allocation10 + $0x2e4] sm:$0xf]
    %v701 = vld [vmem:[#allocation10 + $0x2e8] sm:$0xff]
    %v702 = vld [vmem:[#allocation10 + $0x2f0] sm:$0xf]
    %v703 = vld [vmem:[#allocation10 + $0x2f4] sm:$0xff]
    %v704 = vld [vmem:[#allocation10 + $0x2fc] sm:$0xf]
    %s705 = scalar_lea.vmem %s6, 2
    %v706 = vld [vmem:[%s705] ss:$4 sm:$0x7]
    %v708 = vlaneseq
    %v709 = vshrl.u32 %v708, 7
    %v710 = vsub.s32 0, %v709
    %v711 = vrot.slane %v706, %v710
    %v712 = vlaneseq
    %v713 = vshrl.u32 %v712, 7
    %v714 = vsub.s32 1, %v713
    %v715 = vrot.slane %v706, %v714
    %v716 = vlaneseq
    %v717 = vshrl.u32 %v716, 7
    %v718 = vsub.s32 2, %v717
    %v719 = vrot.slane %v706, %v718
    %v851 = vunpack.c.l.b16 %v577
    %v852 = vunpack.c.h.b16 %v577
    %v853 = vunpack.c.l.b16 %v578
    %v854 = vunpack.c.l.b16 %v579
    %v855 = vunpack.c.h.b16 %v579
    %v856 = vunpack.c.l.b16 %v580
    %v857 = vunpack.c.l.b16 %v581
    %v858 = vunpack.c.h.b16 %v581
    %v859 = vunpack.c.l.b16 %v582
    %v860 = vunpack.c.l.b16 %v583
    %v861 = vunpack.c.h.b16 %v583
    %v862 = vunpack.c.l.b16 %v584
    %v863 = vunpack.c.l.b16 %v585
    %v864 = vunpack.c.h.b16 %v585
    %v865 = vunpack.c.l.b16 %v586
    %v866 = vunpack.c.l.b16 %v587
    %v867 = vunpack.c.h.b16 %v587
    %v868 = vunpack.c.l.b16 %v588
    %v869 = vunpack.c.l.b16 %v589
    %v870 = vunpack.c.h.b16 %v589
    %v871 = vunpack.c.l.b16 %v590
    %v872 = vunpack.c.l.b16 %v591
    %v873 = vunpack.c.h.b16 %v591
    %v874 = vunpack.c.l.b16 %v592
    %v875 = vunpack.c.l.b16 %v593
    %v876 = vunpack.c.h.b16 %v593
    %v877 = vunpack.c.l.b16 %v594
    %v878 = vunpack.c.l.b16 %v595
    %v879 = vunpack.c.h.b16 %v595
    %v880 = vunpack.c.l.b16 %v596
    %v881 = vunpack.c.l.b16 %v597
    %v882 = vunpack.c.h.b16 %v597
    %v883 = vunpack.c.l.b16 %v598
    %v884 = vunpack.c.l.b16 %v599
    %v885 = vunpack.c.h.b16 %v599
    %v886 = vunpack.c.l.b16 %v600
    %v887 = vunpack.c.l.b16 %v601
    %v888 = vunpack.c.h.b16 %v601
    %v889 = vunpack.c.l.b16 %v602
    %v890 = vunpack.c.l.b16 %v603
    %v891 = vunpack.c.h.b16 %v603
    %v892 = vunpack.c.l.b16 %v604
    %v893 = vunpack.c.l.b16 %v605
    %v894 = vunpack.c.h.b16 %v605
    %v895 = vunpack.c.l.b16 %v606
    %v896 = vunpack.c.l.b16 %v607
    %v897 = vunpack.c.h.b16 %v607
    %v898 = vunpack.c.l.b16 %v608
    %v899 = vunpack.c.l.b16 %v609
    %v900 = vunpack.c.h.b16 %v609
    %v901 = vunpack.c.l.b16 %v610
    %v902 = vunpack.c.l.b16 %v611
    %v903 = vunpack.c.h.b16 %v611
    %v904 = vunpack.c.l.b16 %v612
    %v905 = vunpack.c.l.b16 %v613
    %v906 = vunpack.c.h.b16 %v613
    %v907 = vunpack.c.l.b16 %v614
    %v908 = vunpack.c.l.b16 %v615
    %v909 = vunpack.c.h.b16 %v615
    %v910 = vunpack.c.l.b16 %v616
    %v911 = vunpack.c.l.b16 %v617
    %v912 = vunpack.c.h.b16 %v617
    %v913 = vunpack.c.l.b16 %v618
    %v914 = vunpack.c.l.b16 %v619
    %v915 = vunpack.c.h.b16 %v619
    %v916 = vunpack.c.l.b16 %v620
    %v917 = vunpack.c.l.b16 %v621
    %v918 = vunpack.c.h.b16 %v621
    %v919 = vunpack.c.l.b16 %v622
    %v920 = vunpack.c.l.b16 %v623
    %v921 = vunpack.c.h.b16 %v623
    %v922 = vunpack.c.l.b16 %v624
    %v923 = vunpack.c.l.b16 %v625
    %v924 = vunpack.c.h.b16 %v625
    %v925 = vunpack.c.l.b16 %v626
    %v926 = vunpack.c.l.b16 %v627
    %v927 = vunpack.c.h.b16 %v627
    %v928 = vunpack.c.l.b16 %v628
    %v929 = vunpack.c.l.b16 %v629
    %v930 = vunpack.c.h.b16 %v629
    %v931 = vunpack.c.l.b16 %v630
    %v932 = vunpack.c.l.b16 %v631
    %v933 = vunpack.c.h.b16 %v631
    %v934 = vunpack.c.l.b16 %v632
    %v935 = vunpack.c.l.b16 %v633
    %v936 = vunpack.c.h.b16 %v633
    %v937 = vunpack.c.l.b16 %v634
    %v938 = vunpack.c.l.b16 %v635
    %v939 = vunpack.c.h.b16 %v635
    %v940 = vunpack.c.l.b16 %v636
    %v941 = vunpack.c.l.b16 %v637
    %v942 = vunpack.c.h.b16 %v637
    %v943 = vunpack.c.l.b16 %v638
    %v944 = vunpack.c.l.b16 %v639
    %v945 = vunpack.c.h.b16 %v639
    %v946 = vunpack.c.l.b16 %v640
    %v947 = vunpack.c.l.b16 %v641
    %v948 = vunpack.c.h.b16 %v641
    %v949 = vunpack.c.l.b16 %v642
    %v950 = vunpack.c.l.b16 %v643
    %v951 = vunpack.c.h.b16 %v643
    %v952 = vunpack.c.l.b16 %v644
    %v953 = vunpack.c.l.b16 %v645
    %v954 = vunpack.c.h.b16 %v645
    %v955 = vunpack.c.l.b16 %v646
    %v956 = vunpack.c.l.b16 %v647
    %v957 = vunpack.c.h.b16 %v647
    %v958 = vunpack.c.l.b16 %v648
    %v959 = vunpack.c.l.b16 %v649
    %v960 = vunpack.c.h.b16 %v649
    %v961 = vunpack.c.l.b16 %v650
    %v962 = vunpack.c.l.b16 %v651
    %v963 = vunpack.c.h.b16 %v651
    %v964 = vunpack.c.l.b16 %v652
    %v965 = vunpack.c.l.b16 %v653
    %v966 = vunpack.c.h.b16 %v653
    %v967 = vunpack.c.l.b16 %v654
    %v968 = vunpack.c.l.b16 %v655
    %v969 = vunpack.c.h.b16 %v655
    %v970 = vunpack.c.l.b16 %v656
    %v971 = vunpack.c.l.b16 %v657
    %v972 = vunpack.c.h.b16 %v657
    %v973 = vunpack.c.l.b16 %v658
    %v974 = vunpack.c.l.b16 %v659
    %v975 = vunpack.c.h.b16 %v659
    %v976 = vunpack.c.l.b16 %v660
    %v977 = vunpack.c.l.b16 %v661
    %v978 = vunpack.c.h.b16 %v661
    %v979 = vunpack.c.l.b16 %v662
    %v980 = vunpack.c.l.b16 %v663
    %v981 = vunpack.c.h.b16 %v663
    %v982 = vunpack.c.l.b16 %v664
    %v983 = vunpack.c.l.b16 %v665
    %v984 = vunpack.c.h.b16 %v665
    %v985 = vunpack.c.l.b16 %v666
    %v986 = vunpack.c.l.b16 %v667
    %v987 = vunpack.c.h.b16 %v667
    %v988 = vunpack.c.l.b16 %v668
    %v989 = vunpack.c.l.b16 %v669
    %v990 = vunpack.c.h.b16 %v669
    %v991 = vunpack.c.l.b16 %v670
    %v992 = vunpack.c.l.b16 %v671
    %v993 = vunpack.c.h.b16 %v671
    %v994 = vunpack.c.l.b16 %v672
    %v995 = vunpack.c.l.b16 %v673
    %v996 = vunpack.c.h.b16 %v673
    %v997 = vunpack.c.l.b16 %v674
    %v998 = vunpack.c.l.b16 %v675
    %v999 = vunpack.c.h.b16 %v675
    %v1000 = vunpack.c.l.b16 %v676
    %v1001 = vunpack.c.l.b16 %v677
    %v1002 = vunpack.c.h.b16 %v677
    %v1003 = vunpack.c.l.b16 %v678
    %v1004 = vunpack.c.l.b16 %v679
    %v1005 = vunpack.c.h.b16 %v679
    %v1006 = vunpack.c.l.b16 %v680
    %v1007 = vunpack.c.l.b16 %v681
    %v1008 = vunpack.c.h.b16 %v681
    %v1009 = vunpack.c.l.b16 %v682
    %v1010 = vunpack.c.l.b16 %v683
    %v1011 = vunpack.c.h.b16 %v683
    %v1012 = vunpack.c.l.b16 %v684
    %v1013 = vunpack.c.l.b16 %v685
    %v1014 = vunpack.c.h.b16 %v685
    %v1015 = vunpack.c.l.b16 %v686
    %v1016 = vunpack.c.l.b16 %v687
    %v1017 = vunpack.c.h.b16 %v687
    %v1018 = vunpack.c.l.b16 %v688
    %v1019 = vunpack.c.l.b16 %v689
    %v1020 = vunpack.c.h.b16 %v689
    %v1021 = vunpack.c.l.b16 %v690
    %v1022 = vunpack.c.l.b16 %v691
    %v1023 = vunpack.c.h.b16 %v691
    %v1024 = vunpack.c.l.b16 %v692
    %v1025 = vunpack.c.l.b16 %v693
    %v1026 = vunpack.c.h.b16 %v693
    %v1027 = vunpack.c.l.b16 %v694
    %v1028 = vunpack.c.l.b16 %v695
    %v1029 = vunpack.c.h.b16 %v695
    %v1030 = vunpack.c.l.b16 %v696
    %v1031 = vunpack.c.l.b16 %v697
    %v1032 = vunpack.c.h.b16 %v697
    %v1033 = vunpack.c.l.b16 %v698
    %v1034 = vunpack.c.l.b16 %v699
    %v1035 = vunpack.c.h.b16 %v699
    %v1036 = vunpack.c.l.b16 %v700
    %v1037 = vunpack.c.l.b16 %v701
    %v1038 = vunpack.c.h.b16 %v701
    %v1039 = vunpack.c.l.b16 %v702
    %v1040 = vunpack.c.l.b16 %v703
    %v1041 = vunpack.c.h.b16 %v703
    %v1042 = vunpack.c.l.b16 %v704
    %v1043 = vpack.c.b16 %v854, %v851
    %v1044 = vpack.c.b16 %v855, %v852
    %v1045 = vpack.c.b16 %v856, %v853
    %v1046 = vpack.c.b16 %v860, %v857
    %v1047 = vpack.c.b16 %v861, %v858
    %v1048 = vpack.c.b16 %v862, %v859
    %v1049 = vpack.c.b16 %v866, %v863
    %v1050 = vpack.c.b16 %v867, %v864
    %v1051 = vpack.c.b16 %v868, %v865
    %v1052 = vpack.c.b16 %v872, %v869
    %v1053 = vpack.c.b16 %v873, %v870
    %v1054 = vpack.c.b16 %v874, %v871
    %v1055 = vpack.c.b16 %v878, %v875
    %v1056 = vpack.c.b16 %v879, %v876
    %v1057 = vpack.c.b16 %v880, %v877
    %v1058 = vpack.c.b16 %v884, %v881
    %v1059 = vpack.c.b16 %v885, %v882
    %v1060 = vpack.c.b16 %v886, %v883
    %v1061 = vpack.c.b16 %v890, %v887
    %v1062 = vpack.c.b16 %v891, %v888
    %v1063 = vpack.c.b16 %v892, %v889
    %v1064 = vpack.c.b16 %v896, %v893
    %v1065 = vpack.c.b16 %v897, %v894
    %v1066 = vpack.c.b16 %v898, %v895
    %v1067 = vpack.c.b16 %v902, %v899
    %v1068 = vpack.c.b16 %v903, %v900
    %v1069 = vpack.c.b16 %v904, %v901
    %v1070 = vpack.c.b16 %v908, %v905
    %v1071 = vpack.c.b16 %v909, %v906
    %v1072 = vpack.c.b16 %v910, %v907
    %v1073 = vpack.c.b16 %v914, %v911
    %v1074 = vpack.c.b16 %v915, %v912
    %v1075 = vpack.c.b16 %v916, %v913
    %v1076 = vpack.c.b16 %v920, %v917
    %v1077 = vpack.c.b16 %v921, %v918
    %v1078 = vpack.c.b16 %v922, %v919
    %v1079 = vpack.c.b16 %v926, %v923
    %v1080 = vpack.c.b16 %v927, %v924
    %v1081 = vpack.c.b16 %v928, %v925
    %v1082 = vpack.c.b16 %v932, %v929
    %v1083 = vpack.c.b16 %v933, %v930
    %v1084 = vpack.c.b16 %v934, %v931
    %v1085 = vpack.c.b16 %v938, %v935
    %v1086 = vpack.c.b16 %v939, %v936
    %v1087 = vpack.c.b16 %v940, %v937
    %v1088 = vpack.c.b16 %v944, %v941
    %v1089 = vpack.c.b16 %v945, %v942
    %v1090 = vpack.c.b16 %v946, %v943
    %v1091 = vpack.c.b16 %v950, %v947
    %v1092 = vpack.c.b16 %v951, %v948
    %v1093 = vpack.c.b16 %v952, %v949
    %v1094 = vpack.c.b16 %v956, %v953
    %v1095 = vpack.c.b16 %v957, %v954
    %v1096 = vpack.c.b16 %v958, %v955
    %v1097 = vpack.c.b16 %v962, %v959
    %v1098 = vpack.c.b16 %v963, %v960
    %v1099 = vpack.c.b16 %v964, %v961
    %v1100 = vpack.c.b16 %v968, %v965
    %v1101 = vpack.c.b16 %v969, %v966
    %v1102 = vpack.c.b16 %v970, %v967
    %v1103 = vpack.c.b16 %v974, %v971
    %v1104 = vpack.c.b16 %v975, %v972
    %v1105 = vpack.c.b16 %v976, %v973
    %v1106 = vpack.c.b16 %v980, %v977
    %v1107 = vpack.c.b16 %v981, %v978
    %v1108 = vpack.c.b16 %v982, %v979
    %v1109 = vpack.c.b16 %v986, %v983
    %v1110 = vpack.c.b16 %v987, %v984
    %v1111 = vpack.c.b16 %v988, %v985
    %v1112 = vpack.c.b16 %v992, %v989
    %v1113 = vpack.c.b16 %v993, %v990
    %v1114 = vpack.c.b16 %v994, %v991
    %v1115 = vpack.c.b16 %v998, %v995
    %v1116 = vpack.c.b16 %v999, %v996
    %v1117 = vpack.c.b16 %v1000, %v997
    %v1118 = vpack.c.b16 %v1004, %v1001
    %v1119 = vpack.c.b16 %v1005, %v1002
    %v1120 = vpack.c.b16 %v1006, %v1003
    %v1121 = vpack.c.b16 %v1010, %v1007
    %v1122 = vpack.c.b16 %v1011, %v1008
    %v1123 = vpack.c.b16 %v1012, %v1009
    %v1124 = vpack.c.b16 %v1016, %v1013
    %v1125 = vpack.c.b16 %v1017, %v1014
    %v1126 = vpack.c.b16 %v1018, %v1015
    %v1127 = vpack.c.b16 %v1022, %v1019
    %v1128 = vpack.c.b16 %v1023, %v1020
    %v1129 = vpack.c.b16 %v1024, %v1021
    %v1130 = vpack.c.b16 %v1028, %v1025
    %v1131 = vpack.c.b16 %v1029, %v1026
    %v1132 = vpack.c.b16 %v1030, %v1027
    %v1133 = vpack.c.b16 %v1034, %v1031
    %v1134 = vpack.c.b16 %v1035, %v1032
    %v1135 = vpack.c.b16 %v1036, %v1033
    %v1136 = vpack.c.b16 %v1040, %v1037
    %v1137 = vpack.c.b16 %v1041, %v1038
    %v1138 = vpack.c.b16 %v1042, %v1039
    %1235 = vmatprep.subr.bf16.mxu0 %v1044
    %1236 = vmatpush1.bf16.msra.mxu0 %v1043
    %1237 = vmatprep.subr.bf16.mxu0 %v1047
    %1238 = vmatpush1.bf16.msra.mxu0 %v1046
    %1239 = vmatprep.subr.bf16.mxu0 %v1050
    %1240 = vmatpush1.bf16.msra.mxu0 %v1049
    %1241 = vmatprep.subr.bf16.mxu0 %v1053
    %1242 = vmatpush1.bf16.msra.mxu0 %v1052
    %1243 = vmatprep.subr.bf16.mxu0 %v1056
    %1244 = vmatpush1.bf16.msra.mxu0 %v1055
    %1245 = vmatprep.subr.bf16.mxu0 %v1059
    %1246 = vmatpush1.bf16.msra.mxu0 %v1058
    %1247 = vmatprep.subr.bf16.mxu0 %v1062
    %1248 = vmatpush1.bf16.msra.mxu0 %v1061
    %1249 = vmatprep.subr.bf16.mxu0 %v1065
    %1250 = vmatpush1.bf16.msra.mxu0 %v1064
    %1251 = vmatprep.subr.bf16.mxu0 %v1068
    %1252 = vmatpush1.bf16.msra.mxu0 %v1067
    %1253 = vmatprep.subr.bf16.mxu0 %v1071
    %1254 = vmatpush1.bf16.msra.mxu0 %v1070
    %1255 = vmatprep.subr.bf16.mxu0 %v1074
    %1256 = vmatpush1.bf16.msra.mxu0 %v1073
    %1257 = vmatprep.subr.bf16.mxu0 %v1077
    %1258 = vmatpush1.bf16.msra.mxu0 %v1076
    %1259 = vmatprep.subr.bf16.mxu0 %v1080
    %1260 = vmatpush1.bf16.msra.mxu0 %v1079
    %1261 = vmatprep.subr.bf16.mxu0 %v1083
    %1262 = vmatpush1.bf16.msra.mxu0 %v1082
    %1263 = vmatprep.subr.bf16.mxu0 %v1086
    %1264 = vmatpush1.bf16.msra.mxu0 %v1085
    %1265 = vmatprep.subr.bf16.mxu0 %v1089
    %1266 = vmatpush1.bf16.msra.mxu0 %v1088
    %1267 = vmatprep.mubr.bf16.mxu0 %v574
    %1268 = vmatmul.mubr.bf16.gmra.mrb[0].mxu0 %v573
    %v1269 = vpop.f32.mrb[0].mxu0
    %v1270 = vadd.f32 %v711, %v1269
    %v1271 = vpop.f32.mrb[0].mxu0
    %v1272 = vadd.f32 %v715, %v1271
    %v1273 = vpop.f32.mrb[0].mxu0
    %v1274 = vadd.f32 %v711, %v1273
    %v1275 = vpop.f32.mrb[0].mxu0
    %v1276 = vadd.f32 %v715, %v1275
    %1277 = vdwg.mxu0
    %1278 = vmatprep.subr.bf16.mxu0 %v1092
    %1279 = vmatpush1.bf16.msra.mxu0 %v1091
    %1280 = vmatprep.subr.bf16.mxu0 %v1095
    %1281 = vmatpush1.bf16.msra.mxu0 %v1094
    %1282 = vmatprep.subr.bf16.mxu0 %v1098
    %1283 = vmatpush1.bf16.msra.mxu0 %v1097
    %1284 = vmatprep.subr.bf16.mxu0 %v1101
    %1285 = vmatpush1.bf16.msra.mxu0 %v1100
    %1286 = vmatprep.subr.bf16.mxu0 %v1104
    %1287 = vmatpush1.bf16.msra.mxu0 %v1103
    %1288 = vmatprep.subr.bf16.mxu0 %v1107
    %1289 = vmatpush1.bf16.msra.mxu0 %v1106
    %1290 = vmatprep.subr.bf16.mxu0 %v1110
    %1291 = vmatpush1.bf16.msra.mxu0 %v1109
    %1292 = vmatprep.subr.bf16.mxu0 %v1113
    %1293 = vmatpush1.bf16.msra.mxu0 %v1112
    %1294 = vmatprep.subr.bf16.mxu0 %v1116
    %1295 = vmatpush1.bf16.msra.mxu0 %v1115
    %1296 = vmatprep.subr.bf16.mxu0 %v1119
    %1297 = vmatpush1.bf16.msra.mxu0 %v1118
    %1298 = vmatprep.subr.bf16.mxu0 %v1122
    %1299 = vmatpush1.bf16.msra.mxu0 %v1121
    %1300 = vmatprep.subr.bf16.mxu0 %v1125
    %1301 = vmatpush1.bf16.msra.mxu0 %v1124
    %1302 = vmatprep.subr.bf16.mxu0 %v1128
    %1303 = vmatpush1.bf16.msra.mxu0 %v1127
    %1304 = vmatprep.subr.bf16.mxu0 %v1131
    %1305 = vmatpush1.bf16.msra.mxu0 %v1130
    %1306 = vmatprep.subr.bf16.mxu0 %v1134
    %1307 = vmatpush1.bf16.msra.mxu0 %v1133
    %1308 = vmatprep.subr.bf16.mxu0 %v1137
    %1309 = vmatpush1.bf16.msra.mxu0 %v1136
    %1310 = vmatprep.mubr.bf16.mxu0 %v576
    %1311 = vmatmul.mubr.bf16.gmra.mrb[0].mxu0 %v575
    %v1312 = vpop.f32.mrb[0].mxu0
    %v1313 = vadd.f32 %v1270, %v1312
    %v1314 = vpop.f32.mrb[0].mxu0
    %v1315 = vadd.f32 %v1272, %v1314
    %v1316 = vpop.f32.mrb[0].mxu0
    %v1317 = vadd.f32 %v1274, %v1316
    %v1318 = vpop.f32.mrb[0].mxu0
    %v1319 = vadd.f32 %v1276, %v1318
    %1320 = vdwg.mxu0
    %1321 = vmatprep.subr.bf16.mxu0 0
    %1322 = vmatpush1.bf16.msra.mxu0 %v1045
    %1323 = vmatprep.subr.bf16.mxu0 0
    %1324 = vmatpush1.bf16.msra.mxu0 %v1048
    %1325 = vmatprep.subr.bf16.mxu0 0
    %1326 = vmatpush1.bf16.msra.mxu0 %v1051
    %1327 = vmatprep.subr.bf16.mxu0 0
    %1328 = vmatpush1.bf16.msra.mxu0 %v1054
    %1329 = vmatprep.subr.bf16.mxu0 0
    %1330 = vmatpush1.bf16.msra.mxu0 %v1057
    %1331 = vmatprep.subr.bf16.mxu0 0
    %1332 = vmatpush1.bf16.msra.mxu0 %v1060
    %1333 = vmatprep.subr.bf16.mxu0 0
    %1334 = vmatpush1.bf16.msra.mxu0 %v1063
    %1335 = vmatprep.subr.bf16.mxu0 0
    %1336 = vmatpush1.bf16.msra.mxu0 %v1066
    %1337 = vmatprep.subr.bf16.mxu0 0
    %1338 = vmatpush1.bf16.msra.mxu0 %v1069
    %1339 = vmatprep.subr.bf16.mxu0 0
    %1340 = vmatpush1.bf16.msra.mxu0 %v1072
    %1341 = vmatprep.subr.bf16.mxu0 0
    %1342 = vmatpush1.bf16.msra.mxu0 %v1075
    %1343 = vmatprep.subr.bf16.mxu0 0
    %1344 = vmatpush1.bf16.msra.mxu0 %v1078
    %1345 = vmatprep.subr.bf16.mxu0 0
    %1346 = vmatpush1.bf16.msra.mxu0 %v1081
    %1347 = vmatprep.subr.bf16.mxu0 0
    %1348 = vmatpush1.bf16.msra.mxu0 %v1084
    %1349 = vmatprep.subr.bf16.mxu0 0
    %1350 = vmatpush1.bf16.msra.mxu0 %v1087
    %1351 = vmatprep.subr.bf16.mxu0 0
    %1352 = vmatpush1.bf16.msra.mxu0 %v1090
    %1353 = vmatprep.mubr.bf16.mxu0 %v574
    %1354 = vmatmul.mubr.bf16.gmra.mrb[0].mxu0 %v573
    %v1355 = vpop.f32.mrb[0].mxu0
    %v1356 = vadd.f32 %v719, %v1355
    %v1357 = vpop.f32.mrb[0].mxu0
    %v1358 = vpop.f32.mrb[0].mxu0
    %v1359 = vadd.f32 %v719, %v1358
    %v1360 = vpop.f32.mrb[0].mxu0
    %1361 = vdwg.mxu0
    %1362 = vmatprep.subr.bf16.mxu0 0
    %1363 = vmatpush1.bf16.msra.mxu0 %v1093
    %1364 = vmatprep.subr.bf16.mxu0 0
    %1365 = vmatpush1.bf16.msra.mxu0 %v1096
    %1366 = vmatprep.subr.bf16.mxu0 0
    %1367 = vmatpush1.bf16.msra.mxu0 %v1099
    %1368 = vmatprep.subr.bf16.mxu0 0
    %1369 = vmatpush1.bf16.msra.mxu0 %v1102
    %1370 = vmatprep.subr.bf16.mxu0 0
    %1371 = vmatpush1.bf16.msra.mxu0 %v1105
    %1372 = vmatprep.subr.bf16.mxu0 0
    %1373 = vmatpush1.bf16.msra.mxu0 %v1108
    %1374 = vmatprep.subr.bf16.mxu0 0
    %1375 = vmatpush1.bf16.msra.mxu0 %v1111
    %1376 = vmatprep.subr.bf16.mxu0 0
    %1377 = vmatpush1.bf16.msra.mxu0 %v1114
    %1378 = vmatprep.subr.bf16.mxu0 0
    %1379 = vmatpush1.bf16.msra.mxu0 %v1117
    %1380 = vmatprep.subr.bf16.mxu0 0
    %1381 = vmatpush1.bf16.msra.mxu0 %v1120
    %1382 = vmatprep.subr.bf16.mxu0 0
    %1383 = vmatpush1.bf16.msra.mxu0 %v1123
    %1384 = vmatprep.subr.bf16.mxu0 0
    %1385 = vmatpush1.bf16.msra.mxu0 %v1126
    %1386 = vmatprep.subr.bf16.mxu0 0
    %1387 = vmatpush1.bf16.msra.mxu0 %v1129
    %1388 = vmatprep.subr.bf16.mxu0 0
    %1389 = vmatpush1.bf16.msra.mxu0 %v1132
    %1390 = vmatprep.subr.bf16.mxu0 0
    %1391 = vmatpush1.bf16.msra.mxu0 %v1135
    %1392 = vmatprep.subr.bf16.mxu0 0
    %1393 = vmatpush1.bf16.msra.mxu0 %v1138
    %1394 = vmatprep.mubr.bf16.mxu0 %v576
    %1395 = vmatmul.mubr.bf16.gmra.mrb[0].mxu0 %v575
    %v1396 = vpop.f32.mrb[0].mxu0
    %v1397 = vadd.f32 %v1356, %v1396
    %v1398 = vpop.f32.mrb[0].mxu0
    %v1399 = vpop.f32.mrb[0].mxu0
    %v1400 = vadd.f32 %v1359, %v1399
    %v1401 = vpop.f32.mrb[0].mxu0
    %1402 = vdwg.mxu0
    %1403 = vmax.xlane.f32.xlu0 %v1397
    %v1404 = vpop.xlane.xlu0 %1403
    %1405 = vmax.xlane.f32.xlu0 %v1400
    %v1406 = vpop.xlane.xlu0 %1405
    %v1407 = vsub.f32 %v1397, %v1404
    %v1408 = vsub.f32 %v1400, %v1406
    %v1409 = vmul.f32 %v1407, 1.442695
    %v1410 = vpow.pop %v1409
    %v1411 = vmul.f32 %v1408, 1.442695
    %v1412 = vpow.pop %v1411
    %1413 = vadd.xlane.f32.xlu0 %v1410
    %v1414 = vpop.xlane.xlu0 %1413
    %1415 = vadd.xlane.f32.xlu0 %v1412
    %v1416 = vpop.xlane.xlu0 %1415
    %v1417 = vlog2.pop %v1414
    %v1418 = vmul.f32 %v1417, 0.6931472
    %v1419 = vlog2.pop %v1416
    %v1420 = vmul.f32 %v1419, 0.6931472
    %v1421 = vadd.f32 %v1404, %v1418
    %v1422 = vadd.f32 %v1406, %v1420
    %v1423 = vsub.f32 %v1397, %v1421
    %v1424 = vsub.f32 %v1400, %v1422
    %v1425 = vmax.f32 %v1313, 0.0
    %v1426 = vmax.f32 %v1315, 0.0
    %v1427 = vmax.f32 %v1317, 0.0
    %v1428 = vmax.f32 %v1319, 0.0
    %v1429 = vpack.c.bf16 %v1427, %v1425
    %v1430 = vpack.c.bf16 %v1428, %v1426
    %v1431 = vld [vmem:[#allocation11] sm:$0xf]
    %v1432 = vld [vmem:[#allocation11 + $0x4] sm:$0xf]
    %v1433 = vld [vmem:[#allocation11 + $0x8] sm:$0xf]
    %v1434 = vld [vmem:[#allocation11 + $0xc] sm:$0xf]
    %v1435 = vld [vmem:[#allocation11 + $0x10] sm:$0xf]
    %v1436 = vld [vmem:[#allocation11 + $0x14] sm:$0xf]
    %v1437 = vld [vmem:[#allocation11 + $0x18] sm:$0xf]
    %v1438 = vld [vmem:[#allocation11 + $0x1c] sm:$0xf]
    %v1439 = vld [vmem:[#allocation11 + $0x20] sm:$0xf]
    %v1440 = vld [vmem:[#allocation11 + $0x24] sm:$0xf]
    %v1441 = vld [vmem:[#allocation11 + $0x28] sm:$0xf]
    %v1442 = vld [vmem:[#allocation11 + $0x2c] sm:$0xf]
    %v1443 = vld [vmem:[#allocation11 + $0x30] sm:$0xf]
    %v1444 = vld [vmem:[#allocation11 + $0x34] sm:$0xf]
    %v1445 = vld [vmem:[#allocation11 + $0x38] sm:$0xf]
    %v1446 = vld [vmem:[#allocation11 + $0x3c] sm:$0xf]
    %v1447 = vld [vmem:[#allocation11 + $0x40] sm:$0xf]
    %v1448 = vld [vmem:[#allocation11 + $0x44] sm:$0xf]
    %v1449 = vld [vmem:[#allocation11 + $0x48] sm:$0xf]
    %v1450 = vld [vmem:[#allocation11 + $0x4c] sm:$0xf]
    %v1451 = vld [vmem:[#allocation11 + $0x50] sm:$0xf]
    %v1452 = vld [vmem:[#allocation11 + $0x54] sm:$0xf]
    %v1453 = vld [vmem:[#allocation11 + $0x58] sm:$0xf]
    %v1454 = vld [vmem:[#allocation11 + $0x5c] sm:$0xf]
    %v1455 = vld [vmem:[#allocation11 + $0x60] sm:$0xf]
    %v1456 = vld [vmem:[#allocation11 + $0x64] sm:$0xf]
    %v1457 = vld [vmem:[#allocation11 + $0x68] sm:$0xf]
    %v1458 = vld [vmem:[#allocation11 + $0x6c] sm:$0xf]
    %v1459 = vld [vmem:[#allocation11 + $0x70] sm:$0xf]
    %v1460 = vld [vmem:[#allocation11 + $0x74] sm:$0xf]
    %v1461 = vld [vmem:[#allocation11 + $0x78] sm:$0xf]
    %v1462 = vld [vmem:[#allocation11 + $0x7c] sm:$0xf]
    %v1463 = vld [vmem:[%s6 + $0x3] sm:$0x1]
    %v1464 = vlaneseq
    %v1465 = vshrl.u32 %v1464, 7
    %v1466 = vsub.s32 0, %v1465
    %v1467 = vrot.slane %v1463, %v1466
    %v1500 = vunpack.c.l.b16 %v1431
    %v1501 = vunpack.c.l.b16 %v1432
    %v1502 = vunpack.c.l.b16 %v1433
    %v1503 = vunpack.c.l.b16 %v1434
    %v1504 = vunpack.c.l.b16 %v1435
    %v1505 = vunpack.c.l.b16 %v1436
    %v1506 = vunpack.c.l.b16 %v1437
    %v1507 = vunpack.c.l.b16 %v1438
    %v1508 = vunpack.c.l.b16 %v1439
    %v1509 = vunpack.c.l.b16 %v1440
    %v1510 = vunpack.c.l.b16 %v1441
    %v1511 = vunpack.c.l.b16 %v1442
    %v1512 = vunpack.c.l.b16 %v1443
    %v1513 = vunpack.c.l.b16 %v1444
    %v1514 = vunpack.c.l.b16 %v1445
    %v1515 = vunpack.c.l.b16 %v1446
    %v1516 = vunpack.c.l.b16 %v1447
    %v1517 = vunpack.c.l.b16 %v1448
    %v1518 = vunpack.c.l.b16 %v1449
    %v1519 = vunpack.c.l.b16 %v1450
    %v1520 = vunpack.c.l.b16 %v1451
    %v1521 = vunpack.c.l.b16 %v1452
    %v1522 = vunpack.c.l.b16 %v1453
    %v1523 = vunpack.c.l.b16 %v1454
    %v1524 = vunpack.c.l.b16 %v1455
    %v1525 = vunpack.c.l.b16 %v1456
    %v1526 = vunpack.c.l.b16 %v1457
    %v1527 = vunpack.c.l.b16 %v1458
    %v1528 = vunpack.c.l.b16 %v1459
    %v1529 = vunpack.c.l.b16 %v1460
    %v1530 = vunpack.c.l.b16 %v1461
    %v1531 = vunpack.c.l.b16 %v1462
    %v1532 = vpack.c.b16 %v1501, %v1500
    %v1533 = vpack.c.b16 %v1503, %v1502
    %v1534 = vpack.c.b16 %v1505, %v1504
    %v1535 = vpack.c.b16 %v1507, %v1506
    %v1536 = vpack.c.b16 %v1509, %v1508
    %v1537 = vpack.c.b16 %v1511, %v1510
    %v1538 = vpack.c.b16 %v1513, %v1512
    %v1539 = vpack.c.b16 %v1515, %v1514
    %v1540 = vpack.c.b16 %v1517, %v1516
    %v1541 = vpack.c.b16 %v1519, %v1518
    %v1542 = vpack.c.b16 %v1521, %v1520
    %v1543 = vpack.c.b16 %v1523, %v1522
    %v1544 = vpack.c.b16 %v1525, %v1524
    %v1545 = vpack.c.b16 %v1527, %v1526
    %v1546 = vpack.c.b16 %v1529, %v1528
    %v1547 = vpack.c.b16 %v1531, %v1530
    %1564 = vmatprep.subr.bf16.mxu0 0
    %1565 = vmatpush1.bf16.msra.mxu0 %v1532
    %1566 = vmatprep.subr.bf16.mxu0 0
    %1567 = vmatpush1.bf16.msra.mxu0 %v1533
    %1568 = vmatprep.subr.bf16.mxu0 0
    %1569 = vmatpush1.bf16.msra.mxu0 %v1534
    %1570 = vmatprep.subr.bf16.mxu0 0
    %1571 = vmatpush1.bf16.msra.mxu0 %v1535
    %1572 = vmatprep.subr.bf16.mxu0 0
    %1573 = vmatpush1.bf16.msra.mxu0 %v1536
    %1574 = vmatprep.subr.bf16.mxu0 0
    %1575 = vmatpush1.bf16.msra.mxu0 %v1537
    %1576 = vmatprep.subr.bf16.mxu0 0
    %1577 = vmatpush1.bf16.msra.mxu0 %v1538
    %1578 = vmatprep.subr.bf16.mxu0 0
    %1579 = vmatpush1.bf16.msra.mxu0 %v1539
    %1580 = vmatprep.subr.bf16.mxu0 0
    %1581 = vmatpush1.bf16.msra.mxu0 %v1540
    %1582 = vmatprep.subr.bf16.mxu0 0
    %1583 = vmatpush1.bf16.msra.mxu0 %v1541
    %1584 = vmatprep.subr.bf16.mxu0 0
    %1585 = vmatpush1.bf16.msra.mxu0 %v1542
    %1586 = vmatprep.subr.bf16.mxu0 0
    %1587 = vmatpush1.bf16.msra.mxu0 %v1543
    %1588 = vmatprep.subr.bf16.mxu0 0
    %1589 = vmatpush1.bf16.msra.mxu0 %v1544
    %1590 = vmatprep.subr.bf16.mxu0 0
    %1591 = vmatpush1.bf16.msra.mxu0 %v1545
    %1592 = vmatprep.subr.bf16.mxu0 0
    %1593 = vmatpush1.bf16.msra.mxu0 %v1546
    %1594 = vmatprep.subr.bf16.mxu0 0
    %1595 = vmatpush1.bf16.msra.mxu0 %v1547
    %1596 = vmatprep.mubr.bf16.mxu0 %v1430
    %1597 = vmatmul.mubr.bf16.gmra.mrb[0].mxu0 %v1429
    %v1598 = vpop.f32.mrb[0].mxu0
    %v1599 = vadd.f32 %v1467, %v1598
    %v1600 = vpop.f32.mrb[0].mxu0
    %v1601 = vpop.f32.mrb[0].mxu0
    %v1602 = vadd.f32 %v1467, %v1601
    %v1603 = vpop.f32.mrb[0].mxu0
    %1604 = vdwg.mxu0
    %v1605 = vlaneseq
    %v1606 = vand.u32 %v1605, 127
    %vm1607 = vcmp.lt.s32.totalorder %v1606, 8
    %v1608 = vsel %vm1607, %v1423, %v1599
    %v1609 = vsel %vm1607, %v1424, %v1602
    %1610 = vst [vmem:[#allocation13] sm:$0xff] %v1608
    %1611 = vst [vmem:[#allocation13 + $0x8] sm:$0xff] %v1609
    // Predicated region
    $region54: #{tpu_custom_call.1} parent=1 // pred_check
      _
    $region55: #{tpu_custom_call.1} parent=1 // pred_check_branch
      %1613 = sbr.rel (0) target = $region57
    $region56: #{tpu_custom_call.1} parent=1 // pred_region
      %s1615 = ssub.s32 256, 256
      %1616 = vsyncadd [#allocation4], %s1615
      %s1617 = sshll.u32 [#allocation13], 4
      %s1618 = int_to_ptr.vmem [resolvable:$true] %s1617
      %1623 = dma.vmem_to_hbm [thread:$0]  %s1618, 256, %s7, [#allocation4], 128, 128, 8
    $region57: #{tpu_custom_call.1} parent=1 // pred_fallthru
      _
    // Predicated region
    $region58: #{tpu_custom_call.1} parent=1 // pred_check
      _
    $region59: #{tpu_custom_call.1} parent=1 // pred_check_branch
      %1625 = sbr.rel (0) target = $region61
    $region60: #{tpu_custom_call.1} parent=1 // pred_region
      %1626 = dma.done [#allocation4], 256
    $region61: #{tpu_custom_call.1} parent=1 // pred_fallthru
      _
    %1627 = vsyncpa [#allocation3], 1
    %1628 = vsyncpa [#allocation6], 1
    %1629 = vsyncpa [#allocation9], 1
    %1630 = vsyncpa [#allocation12], 1
    %1631 = vsyncpa [#allocation4], 1

</llo_original>
